<compile_context>
chip_gen: v5e
topology: v5e:2x2
jax: 0.10.0
libtpu: 0.0.40
codegen_flags: <defaults>
</compile_context>

<pallas_src>
import math

import jax
import jax.numpy as jnp
from jax import lax
from jax.experimental import pallas as pl
from jax.experimental.pallas import tpu as pltpu

EPS = 1e-5


def _patch_expand_kernel(x_ref, w_ref, g2_ref, b2_ref, o_ref):
    # x_ref:  (TG*W, dim)            input token rows (cast to bf16 for MXU)
    # w_ref:  (dim, 4*c)  bf16       expand weight, VMEM-resident
    # g2_ref, b2_ref: (1, 2*c) f32   LayerNorm affine, tiled x2 along lanes
    # o_ref:  (TG, 2, W, 2*c)        pixel-shuffle-fused output layout
    x = x_ref[...].astype(jnp.bfloat16)
    y = jnp.dot(x, w_ref[...], preferred_element_type=jnp.float32)   # (TM, 4c)

    tg, _, w_sp, two_c = o_ref.shape
    c = two_c // 2
    inv_c = 1.0 / c
    gamma2 = g2_ref[...]          # (1, 2c) == concat([gamma, gamma])
    beta2 = b2_ref[...]           # (1, 2c)

    # LayerNorm per sub-token on static lane slices of y; each output half
    # (p1) is assembled as one (TM, 2c) slab and written with a single store.
    for p1 in range(2):
        chunks = []
        for p2 in range(2):
            k = 2 * p1 + p2
            yk = y[:, k * c:(k + 1) * c]                              # (TM, c)
            mean = jnp.sum(yk, axis=-1, keepdims=True) * inv_c
            diff = yk - mean
            var = jnp.sum(diff * diff, axis=-1, keepdims=True) * inv_c
            chunks.append(diff * lax.rsqrt(var + EPS))
        half = jnp.concatenate(chunks, axis=-1) * gamma2 + beta2      # (TM, 2c)
        o_ref[:, p1:p1 + 1, :, :] = (
            half.reshape(tg, 1, w_sp, two_c).astype(o_ref.dtype))


def _choose_group_tile(groups, w_sp, dim, c, target_rows, x_itemsize,
                       out_itemsize, vmem_budget=20 * 2**20):
    """Pick TG (= (b,h) groups per block) so TG*W ~ target_rows, TG*W % 8 == 0,
    and the double-buffered block footprint stays inside a cross-gen-safe
    VMEM budget (v7x has only 64 MiB physical VMEM)."""
    m = 8 // math.gcd(w_sp, 8)                       # TG multiple => TG*W % 8 == 0
    per_tg = w_sp * (2 * dim * x_itemsize            # x block, double-buffered
                     + 2 * 4 * c * out_itemsize      # out block, double-buffered
                     + 2 * 4 * c * 4)                # f32 matmul result + LN temps
    tg_cap = max(1, int(vmem_budget // per_tg))
    tg = max(1, min(groups, max(1, target_rows // w_sp), tg_cap))
    tg = max(m, (tg // m) * m)
    return tg


def patch_expand(x, w_expand, ln_gamma, ln_beta, input_resolution, *,
                 target_block_rows=512, out_dtype=jnp.float32):
    """x: (B, H*W, dim) -> (B, 4*H*W, dim//2)   (dim_scale == 2 path)."""
    B, L, dim = x.shape
    H = W = input_resolution
    assert L == H * W, "input feature has wrong size"
    assert dim % 2 == 0
    c = dim // 2
    two_c = 2 * c
    four_c = 4 * c

    groups = B * H                                   # rows come in (b, h) groups of W
    tg = _choose_group_tile(groups, W, dim, c, target_block_rows,
                            x.dtype.itemsize, jnp.dtype(out_dtype).itemsize)
    groups_pad = pl.cdiv(groups, tg) * tg
    tm = tg * W                                      # token rows per block

    x_flat = x.reshape(B * L, dim)
    if groups_pad != groups:                         # pad tail groups (no divisibility assert)
        x_flat = jnp.pad(x_flat, ((0, (groups_pad - groups) * W), (0, 0)))

    w_bf16 = w_expand.astype(jnp.bfloat16)           # cast once; single-pass MXU
    gamma2 = jnp.concatenate(
        [ln_gamma, ln_gamma]).reshape(1, two_c).astype(jnp.float32)
    beta2 = jnp.concatenate(
        [ln_beta, ln_beta]).reshape(1, two_c).astype(jnp.float32)

    grid = (groups_pad // tg,)

    # VMEM estimate: resident weight + double-buffered x/out blocks + f32 temps.
    est = (dim * four_c * 2
           + 2 * tm * dim * x_flat.dtype.itemsize
           + 2 * tm * four_c * jnp.dtype(out_dtype).itemsize
           + 2 * tm * four_c * 4)
    cp_kwargs = dict(dimension_semantics=("parallel",))
    if est > 30 * 2**20:                             # only override when default is too small
        cp_kwargs["vmem_limit_bytes"] = int(min(64 * 2**20, est * 1.5))

    out4 = pl.pallas_call(
        _patch_expand_kernel,
        out_shape=jax.ShapeDtypeStruct((groups_pad, 2, W, two_c), out_dtype),
        grid_spec=pltpu.PrefetchScalarGridSpec(
            num_scalar_prefetch=0,
            grid=grid,
            in_specs=[
                pl.BlockSpec((tm, dim), lambda i: (i, 0)),        # x rows
                pl.BlockSpec((dim, four_c), lambda i: (0, 0)),    # resident weight
                pl.BlockSpec((1, two_c), lambda i: (0, 0)),       # LN gamma (tiled x2)
                pl.BlockSpec((1, two_c), lambda i: (0, 0)),       # LN beta  (tiled x2)
            ],
            out_specs=pl.BlockSpec((tg, 2, W, two_c), lambda i: (i, 0, 0, 0)),
        ),
        compiler_params=pltpu.CompilerParams(**cp_kwargs),
    )(x_flat, w_bf16, gamma2, beta2)

    out4 = out4[:groups]                             # drop group padding
    # (B*H, 2, W, 2c) row-major == (B, H, p1, W, p2, c) == (B, 2H, 2W, c):
    # pure reshape, no transpose, no extra HBM round trip.
    return out4.reshape(B, 4 * H * W, c)


def _reference(x, w_expand, ln_gamma, ln_beta, input_resolution):
    """Pure-JAX f32 reference matching the PyTorch forward."""
    B, L, dim = x.shape
    H = W = input_resolution
    y = x @ w_expand                                  # Linear(dim, 2*dim), no bias
    C = 2 * dim
    c = C // 4
    y = y.reshape(B, H, W, 2, 2, c).transpose(0, 1, 3, 2, 4, 5).reshape(B, 4 * H * W, c)
    mean = y.mean(-1, keepdims=True)
    var = ((y - mean) ** 2).mean(-1, keepdims=True)
    y = (y - mean) / jnp.sqrt(var + EPS)
    return y * ln_gamma + ln_beta


if __name__ == "__main__":
    key = jax.random.PRNGKey(0)
    B, res, dim = 2, 8, 64            # x: (B, H*W, dim) = (2, 64, 64)
    k1, k2 = jax.random.split(key)

    x = jax.random.normal(k1, (B, res * res, dim), dtype=jnp.float32)
    # nn.Linear(dim, 2*dim, bias=False) weight stored as (dim, 2*dim): fwd is x @ W
    w_expand = jax.random.normal(k2, (dim, 2 * dim), dtype=jnp.float32) * 0.02
    # nn.LayerNorm(dim // 2) params (default init: ones / zeros)
    ln_gamma = jnp.ones((dim // 2,), dtype=jnp.float32)
    ln_beta = jnp.zeros((dim // 2,), dtype=jnp.float32)

    out = patch_expand(x, w_expand, ln_gamma, ln_beta, res)
    out = jax.block_until_ready(out)

    ref = _reference(x, w_expand, ln_gamma, ln_beta, res)
    assert out.shape == (B, 4 * res * res, dim // 2), out.shape
    # bf16 MXU operands (f32 accumulation) vs f32 reference -> loosened tolerance.
    max_err = float(jnp.max(jnp.abs(out - ref)))
    assert jnp.allclose(out, ref, atol=5e-2, rtol=5e-2), max_err

    print("KERNEL_OK")
</pallas_src>

<mosaic_0001>
module attributes {stable_mosaic.version = 11 : i64} {
  func.func @_patch_expand_kernel(%arg0: i32, %arg1: memref<128x64xf32, #tpu.memory_space<vmem>>, %arg2: memref<64x128xbf16, #tpu.memory_space<vmem>>, %arg3: memref<1x64xf32, #tpu.memory_space<vmem>>, %arg4: memref<1x64xf32, #tpu.memory_space<vmem>>, %arg5: memref<16x2x8x64xf32, #tpu.memory_space<vmem>>) attributes {dimension_semantics = [#tpu.dimension_semantics<parallel>], iteration_bounds = array<i64: 1>, scalar_prefetch = 0 : i64, scratch_operands = 0 : i64, tpu.core_type = #tpu.core_type<tc>, window_params = [{transform_indices = @transform_0, window_bounds = array<i64: 128, 64>}, {pipeline_mode = #tpu.pipeline_mode<synchronous>, transform_indices = @transform_1, window_bounds = array<i64: 64, 128>}, {pipeline_mode = #tpu.pipeline_mode<synchronous>, transform_indices = @transform_2, window_bounds = array<i64: 1, 64>}, {pipeline_mode = #tpu.pipeline_mode<synchronous>, transform_indices = @transform_3, window_bounds = array<i64: 1, 64>}, {transform_indices = @transform_4, window_bounds = array<i64: 16, 2, 8, 64>}]} {
    %c0 = arith.constant 0 : index
    %c0_0 = arith.constant 0 : index
    %0 = vector.load %arg1[%c0, %c0_0] : memref<128x64xf32, #tpu.memory_space<vmem>>, vector<128x64xf32>
    %1 = arith.truncf %0 : vector<128x64xf32> to vector<128x64xbf16>
    %c0_1 = arith.constant 0 : index
    %c0_2 = arith.constant 0 : index
    %2 = vector.load %arg2[%c0_1, %c0_2] : memref<64x128xbf16, #tpu.memory_space<vmem>>, vector<64x128xbf16>
    %cst = arith.constant dense<0.000000e+00> : vector<128x128xf32>
    %3 = tpu.matmul %1, %2, %cst {dimension_numbers = #tpu.dot_dimension_numbers<[1], [0], [0], [1], [0, 0, 1, 1], [], []>} : vector<128x64xbf16>, vector<64x128xbf16>, vector<128x128xf32> -> vector<128x128xf32>
    %c0_3 = arith.constant 0 : index
    %c0_4 = arith.constant 0 : index
    %4 = vector.load %arg3[%c0_3, %c0_4] : memref<1x64xf32, #tpu.memory_space<vmem>>, vector<1x64xf32>
    %c0_5 = arith.constant 0 : index
    %c0_6 = arith.constant 0 : index
    %5 = vector.load %arg4[%c0_5, %c0_6] : memref<1x64xf32, #tpu.memory_space<vmem>>, vector<1x64xf32>
    %6 = vector.extract_strided_slice %3 {offsets = [0, 0], sizes = [128, 32], strides = [1, 1]} : vector<128x128xf32> to vector<128x32xf32>
    %cst_7 = arith.constant dense<0.000000e+00> : vector<128xf32>
    %7 = vector.multi_reduction <add>, %6, %cst_7 [1] : vector<128x32xf32> to vector<128xf32>
    %8 = vector.shape_cast %7 : vector<128xf32> to vector<128x1xf32>
    %cst_8 = arith.constant 3.125000e-02 : f32
    %9 = vector.broadcast %cst_8 : f32 to vector<128x1xf32>
    %10 = arith.mulf %8, %9 : vector<128x1xf32>
    %11 = vector.broadcast %10 : vector<128x1xf32> to vector<128x32xf32>
    %12 = arith.subf %6, %11 : vector<128x32xf32>
    %13 = arith.mulf %12, %12 : vector<128x32xf32>
    %cst_9 = arith.constant dense<0.000000e+00> : vector<128xf32>
    %14 = vector.multi_reduction <add>, %13, %cst_9 [1] : vector<128x32xf32> to vector<128xf32>
    %15 = vector.shape_cast %14 : vector<128xf32> to vector<128x1xf32>
    %cst_10 = arith.constant 3.125000e-02 : f32
    %16 = vector.broadcast %cst_10 : f32 to vector<128x1xf32>
    %17 = arith.mulf %15, %16 : vector<128x1xf32>
    %cst_11 = arith.constant 9.99999974E-6 : f32
    %18 = vector.broadcast %cst_11 : f32 to vector<128x1xf32>
    %19 = arith.addf %17, %18 : vector<128x1xf32>
    %20 = math.rsqrt %19 : vector<128x1xf32>
    %21 = vector.broadcast %20 : vector<128x1xf32> to vector<128x32xf32>
    %22 = arith.mulf %12, %21 : vector<128x32xf32>
    %23 = vector.extract_strided_slice %3 {offsets = [0, 32], sizes = [128, 32], strides = [1, 1]} : vector<128x128xf32> to vector<128x32xf32>
    %cst_12 = arith.constant dense<0.000000e+00> : vector<128xf32>
    %24 = vector.multi_reduction <add>, %23, %cst_12 [1] : vector<128x32xf32> to vector<128xf32>
    %25 = vector.shape_cast %24 : vector<128xf32> to vector<128x1xf32>
    %cst_13 = arith.constant 3.125000e-02 : f32
    %26 = vector.broadcast %cst_13 : f32 to vector<128x1xf32>
    %27 = arith.mulf %25, %26 : vector<128x1xf32>
    %28 = vector.broadcast %27 : vector<128x1xf32> to vector<128x32xf32>
    %29 = arith.subf %23, %28 : vector<128x32xf32>
    %30 = arith.mulf %29, %29 : vector<128x32xf32>
    %cst_14 = arith.constant dense<0.000000e+00> : vector<128xf32>
    %31 = vector.multi_reduction <add>, %30, %cst_14 [1] : vector<128x32xf32> to vector<128xf32>
    %32 = vector.shape_cast %31 : vector<128xf32> to vector<128x1xf32>
    %cst_15 = arith.constant 3.125000e-02 : f32
    %33 = vector.broadcast %cst_15 : f32 to vector<128x1xf32>
    %34 = arith.mulf %32, %33 : vector<128x1xf32>
    %cst_16 = arith.constant 9.99999974E-6 : f32
    %35 = vector.broadcast %cst_16 : f32 to vector<128x1xf32>
    %36 = arith.addf %34, %35 : vector<128x1xf32>
    %37 = math.rsqrt %36 : vector<128x1xf32>
    %38 = vector.broadcast %37 : vector<128x1xf32> to vector<128x32xf32>
    %39 = arith.mulf %29, %38 : vector<128x32xf32>
    %40 = tpu.concatenate %22, %39 in 1 : vector<128x32xf32>, vector<128x32xf32> -> vector<128x64xf32>
    %41 = vector.broadcast %4 : vector<1x64xf32> to vector<128x64xf32>
    %42 = arith.mulf %40, %41 : vector<128x64xf32>
    %43 = vector.broadcast %5 : vector<1x64xf32> to vector<128x64xf32>
    %44 = arith.addf %42, %43 : vector<128x64xf32>
    %45 = vector.shape_cast %44 : vector<128x64xf32> to vector<16x1x8x64xf32>
    %c0_17 = arith.constant 0 : index
    %c0_18 = arith.constant 0 : index
    %c0_19 = arith.constant 0 : index
    %c0_20 = arith.constant 0 : index
    %46 = vector.load %arg5[%c0_17, %c0_18, %c0_19, %c0_20] : memref<16x2x8x64xf32, #tpu.memory_space<vmem>>, vector<16x1x8x64xf32>
    tpu.vector_store %arg5[%c0_17, %c0_18, %c0_19, %c0_20], %45 {strides = array<i32>} : memref<16x2x8x64xf32, #tpu.memory_space<vmem>>, vector<16x1x8x64xf32>,
    %47 = vector.extract_strided_slice %3 {offsets = [0, 64], sizes = [128, 32], strides = [1, 1]} : vector<128x128xf32> to vector<128x32xf32>
    %cst_21 = arith.constant dense<0.000000e+00> : vector<128xf32>
    %48 = vector.multi_reduction <add>, %47, %cst_21 [1] : vector<128x32xf32> to vector<128xf32>
    %49 = vector.shape_cast %48 : vector<128xf32> to vector<128x1xf32>
    %cst_22 = arith.constant 3.125000e-02 : f32
    %50 = vector.broadcast %cst_22 : f32 to vector<128x1xf32>
    %51 = arith.mulf %49, %50 : vector<128x1xf32>
    %52 = vector.broadcast %51 : vector<128x1xf32> to vector<128x32xf32>
    %53 = arith.subf %47, %52 : vector<128x32xf32>
    %54 = arith.mulf %53, %53 : vector<128x32xf32>
    %cst_23 = arith.constant dense<0.000000e+00> : vector<128xf32>
    %55 = vector.multi_reduction <add>, %54, %cst_23 [1] : vector<128x32xf32> to vector<128xf32>
    %56 = vector.shape_cast %55 : vector<128xf32> to vector<128x1xf32>
    %cst_24 = arith.constant 3.125000e-02 : f32
    %57 = vector.broadcast %cst_24 : f32 to vector<128x1xf32>
    %58 = arith.mulf %56, %57 : vector<128x1xf32>
    %cst_25 = arith.constant 9.99999974E-6 : f32
    %59 = vector.broadcast %cst_25 : f32 to vector<128x1xf32>
    %60 = arith.addf %58, %59 : vector<128x1xf32>
    %61 = math.rsqrt %60 : vector<128x1xf32>
    %62 = vector.broadcast %61 : vector<128x1xf32> to vector<128x32xf32>
    %63 = arith.mulf %53, %62 : vector<128x32xf32>
    %64 = vector.extract_strided_slice %3 {offsets = [0, 96], sizes = [128, 32], strides = [1, 1]} : vector<128x128xf32> to vector<128x32xf32>
    %cst_26 = arith.constant dense<0.000000e+00> : vector<128xf32>
    %65 = vector.multi_reduction <add>, %64, %cst_26 [1] : vector<128x32xf32> to vector<128xf32>
    %66 = vector.shape_cast %65 : vector<128xf32> to vector<128x1xf32>
    %cst_27 = arith.constant 3.125000e-02 : f32
    %67 = vector.broadcast %cst_27 : f32 to vector<128x1xf32>
    %68 = arith.mulf %66, %67 : vector<128x1xf32>
    %69 = vector.broadcast %68 : vector<128x1xf32> to vector<128x32xf32>
    %70 = arith.subf %64, %69 : vector<128x32xf32>
    %71 = arith.mulf %70, %70 : vector<128x32xf32>
    %cst_28 = arith.constant dense<0.000000e+00> : vector<128xf32>
    %72 = vector.multi_reduction <add>, %71, %cst_28 [1] : vector<128x32xf32> to vector<128xf32>
    %73 = vector.shape_cast %72 : vector<128xf32> to vector<128x1xf32>
    %cst_29 = arith.constant 3.125000e-02 : f32
    %74 = vector.broadcast %cst_29 : f32 to vector<128x1xf32>
    %75 = arith.mulf %73, %74 : vector<128x1xf32>
    %cst_30 = arith.constant 9.99999974E-6 : f32
    %76 = vector.broadcast %cst_30 : f32 to vector<128x1xf32>
    %77 = arith.addf %75, %76 : vector<128x1xf32>
    %78 = math.rsqrt %77 : vector<128x1xf32>
    %79 = vector.broadcast %78 : vector<128x1xf32> to vector<128x32xf32>
    %80 = arith.mulf %70, %79 : vector<128x32xf32>
    %81 = tpu.concatenate %63, %80 in 1 : vector<128x32xf32>, vector<128x32xf32> -> vector<128x64xf32>
    %82 = vector.broadcast %4 : vector<1x64xf32> to vector<128x64xf32>
    %83 = arith.mulf %81, %82 : vector<128x64xf32>
    %84 = vector.broadcast %5 : vector<1x64xf32> to vector<128x64xf32>
    %85 = arith.addf %83, %84 : vector<128x64xf32>
    %86 = vector.shape_cast %85 : vector<128x64xf32> to vector<16x1x8x64xf32>
    %c0_31 = arith.constant 0 : index
    %c1 = arith.constant 1 : index
    %c0_32 = arith.constant 0 : index
    %c0_33 = arith.constant 0 : index
    %87 = vector.load %arg5[%c0_31, %c1, %c0_32, %c0_33] : memref<16x2x8x64xf32, #tpu.memory_space<vmem>>, vector<16x1x8x64xf32>
    tpu.vector_store %arg5[%c0_31, %c1, %c0_32, %c0_33], %86 {strides = array<i32>} : memref<16x2x8x64xf32, #tpu.memory_space<vmem>>, vector<16x1x8x64xf32>,
    return
  }
  func.func @transform_0(%arg0: i32) -> (i32, i32) {
    %c0_i32 = arith.constant 0 : i32
    %c0_i32_0 = arith.constant 0 : i32
    return %arg0, %c0_i32 : i32, i32
  }
  func.func @transform_1(%arg0: i32) -> (i32, i32) {
    %c0_i32 = arith.constant 0 : i32
    %c0_i32_0 = arith.constant 0 : i32
    %c0_i32_1 = arith.constant 0 : i32
    return %c0_i32, %c0_i32_0 : i32, i32
  }
  func.func @transform_2(%arg0: i32) -> (i32, i32) {
    %c0_i32 = arith.constant 0 : i32
    %c0_i32_0 = arith.constant 0 : i32
    %c0_i32_1 = arith.constant 0 : i32
    return %c0_i32, %c0_i32_0 : i32, i32
  }
  func.func @transform_3(%arg0: i32) -> (i32, i32) {
    %c0_i32 = arith.constant 0 : i32
    %c0_i32_0 = arith.constant 0 : i32
    %c0_i32_1 = arith.constant 0 : i32
    return %c0_i32, %c0_i32_0 : i32, i32
  }
  func.func @transform_4(%arg0: i32) -> (i32, i32, i32, i32) {
    %c0_i32 = arith.constant 0 : i32
    %c0_i32_0 = arith.constant 0 : i32
    %c0_i32_1 = arith.constant 0 : i32
    %c0_i32_2 = arith.constant 0 : i32
    return %arg0, %c0_i32, %c0_i32_0, %c0_i32_1 : i32, i32, i32, i32
  }
}

</mosaic_0001>

<llo_original>
// kernel: tpu_custom_call.1
$region0: #{tpu_custom_call.1}
  #allocation0 [shape = 'u32[]', space=smem, size = 0x4, offset = 0x4, fixed_abs, tag = 'smem constant byte address 0x4 - core index']
  #allocation1 [shape = 'u32[72,128]{1,0:T(1,128)}', space=vmem, size = 0x9000, scoped, tag = 'internal scratch']
  %s0 = inlined_call_operand.vmem [shape: f32[128,64], index: 0, kind: input, shape index: {}]
  %s1 = inlined_call_operand.vmem [shape: bf16[64,128], index: 1, kind: input, shape index: {}]
  %s2 = inlined_call_operand.vmem [shape: f32[1,64], index: 2, kind: input, shape index: {}]
  %s3 = inlined_call_operand.vmem [shape: f32[1,64], index: 3, kind: input, shape index: {}]
  %s4 = inlined_call_operand.hbm [shape: f32[16,2,8,64], index: 4, kind: output, shape index: {}]
  %s5 = sld [smem:[#allocation0]]
  $region26: #{tpu_custom_call.1} parent=0
    _
  %s7 = ssub.s32 1, %s5
  %s8 = scalar_select 0, %s7, %s5
  $region1: #{tpu_custom_call.1} parent=0
    #allocation2 [shape = 'u8[131072]{0}', space=vmem, size = 0x20000, scoped, tag = 'output window, operand 0, single buffered']
    #allocation3 [shape = 's32[1]{0}', space=sflag, size = 0x4, scoped, tag = 'scoped memory for tpu_custom_call.1']
    %9 = vsyncpa [#allocation3], 0
    // Predicated region
    $region2: #{tpu_custom_call.1} parent=1 // pred_check
      _
    $region3: #{tpu_custom_call.1} parent=1 // pred_check_branch
      %11 = sbr.rel (0) target = $region5
    $region4: #{tpu_custom_call.1} parent=1 // pred_region
      _
    $region5: #{tpu_custom_call.1} parent=1 // pred_fallthru
      _
    // Predicated region
    $region6: #{tpu_custom_call.1} parent=1 // pred_check
      _
    $region7: #{tpu_custom_call.1} parent=1 // pred_check_branch
      %13 = sbr.rel (0) target = $region9
    $region8: #{tpu_custom_call.1} parent=1 // pred_region
      _
    $region9: #{tpu_custom_call.1} parent=1 // pred_fallthru
      _
    // Predicated region
    $region10: #{tpu_custom_call.1} parent=1 // pred_check
      _
    $region11: #{tpu_custom_call.1} parent=1 // pred_check_branch
      %15 = sbr.rel (0) target = $region13
    $region12: #{tpu_custom_call.1} parent=1 // pred_region
      _
    $region13: #{tpu_custom_call.1} parent=1 // pred_fallthru
      _
    // Predicated region
    $region14: #{tpu_custom_call.1} parent=1 // pred_check
      _
    $region15: #{tpu_custom_call.1} parent=1 // pred_check_branch
      %17 = sbr.rel (0) target = $region17
    $region16: #{tpu_custom_call.1} parent=1 // pred_region
      _
    $region17: #{tpu_custom_call.1} parent=1 // pred_fallthru
      _
    %v19 = vld [vmem:[%s0] sm:$0xff]
    %v20 = vld [vmem:[%s0 + $0x8] sm:$0xff]
    %v21 = vld [vmem:[%s0 + $0x10] sm:$0xff]
    %v22 = vld [vmem:[%s0 + $0x18] sm:$0xff]
    %v23 = vld [vmem:[%s0 + $0x20] sm:$0xff]
    %v24 = vld [vmem:[%s0 + $0x28] sm:$0xff]
    %v25 = vld [vmem:[%s0 + $0x30] sm:$0xff]
    %v26 = vld [vmem:[%s0 + $0x38] sm:$0xff]
    %v27 = vld [vmem:[%s0 + $0x40] sm:$0xff]
    %v28 = vld [vmem:[%s0 + $0x48] sm:$0xff]
    %v29 = vld [vmem:[%s0 + $0x50] sm:$0xff]
    %v30 = vld [vmem:[%s0 + $0x58] sm:$0xff]
    %v31 = vld [vmem:[%s0 + $0x60] sm:$0xff]
    %v32 = vld [vmem:[%s0 + $0x68] sm:$0xff]
    %v33 = vld [vmem:[%s0 + $0x70] sm:$0xff]
    %v34 = vld [vmem:[%s0 + $0x78] sm:$0xff]
    %v35 = vpack.c.bf16 %v20, %v19
    %v36 = vpack.c.bf16 %v22, %v21
    %v37 = vpack.c.bf16 %v24, %v23
    %v38 = vpack.c.bf16 %v26, %v25
    %v39 = vpack.c.bf16 %v28, %v27
    %v40 = vpack.c.bf16 %v30, %v29
    %v41 = vpack.c.bf16 %v32, %v31
    %v42 = vpack.c.bf16 %v34, %v33
    %v43 = vld [vmem:[%s1] sm:$0xf]
    %v44 = vld [vmem:[%s1 + $0x4] sm:$0xf]
    %v45 = vld [vmem:[%s1 + $0x8] sm:$0xf]
    %v46 = vld [vmem:[%s1 + $0xc] sm:$0xf]
    %v47 = vld [vmem:[%s1 + $0x10] sm:$0xf]
    %v48 = vld [vmem:[%s1 + $0x14] sm:$0xf]
    %v49 = vld [vmem:[%s1 + $0x18] sm:$0xf]
    %v50 = vld [vmem:[%s1 + $0x1c] sm:$0xf]
    %v59 = vunpack.c.l.b16 %v43
    %v60 = vunpack.c.l.b16 %v44
    %v61 = vunpack.c.l.b16 %v45
    %v62 = vunpack.c.l.b16 %v46
    %v63 = vunpack.c.l.b16 %v47
    %v64 = vunpack.c.l.b16 %v48
    %v65 = vunpack.c.l.b16 %v49
    %v66 = vunpack.c.l.b16 %v50
    %v67 = vpack.c.b16 %v60, %v59
    %v68 = vpack.c.b16 %v62, %v61
    %v69 = vpack.c.b16 %v64, %v63
    %v70 = vpack.c.b16 %v66, %v65
    %vm75 = vcmask 523264
    %v77 = vsel %vm75, %v35, 0
    %v80 = vsel %vm75, %v36, 0
    %v83 = vsel %vm75, %v37, 0
    %v86 = vsel %vm75, %v38, 0
    %v89 = vsel %vm75, %v39, 0
    %v92 = vsel %vm75, %v40, 0
    %v95 = vsel %vm75, %v41, 0
    %v98 = vsel %vm75, %v42, 0
    %100 = vmatpush.bf16.msra.mxu0 0
    %101 = vmatpush.bf16.msra.mxu0 0
    %102 = vmatpush.bf16.msra.mxu0 0
    %103 = vmatpush.bf16.msra.mxu0 0
    %104 = vmatpush.bf16.msra.mxu0 %v70
    %105 = vmatpush.bf16.msra.mxu0 %v69
    %106 = vmatpush.bf16.msra.mxu0 %v68
    %107 = vmatpush.bf16.msra.mxu0 %v67
    %108 = vmatmul.bf16.gmra.mxu0 %v77
    %v109 = vpop.f32.mrf.mxu0
    %v110 = vadd.f32 0.0, %v109
    %v111 = vpop.f32.mrf.mxu0
    %v112 = vadd.f32 0.0, %v111
    %113 = vmatmul.bf16.gmra.mxu0 %v80
    %v114 = vpop.f32.mrf.mxu0
    %v115 = vadd.f32 0.0, %v114
    %v116 = vpop.f32.mrf.mxu0
    %v117 = vadd.f32 0.0, %v116
    %118 = vmatmul.bf16.gmra.mxu0 %v83
    %v119 = vpop.f32.mrf.mxu0
    %v120 = vadd.f32 0.0, %v119
    %v121 = vpop.f32.mrf.mxu0
    %v122 = vadd.f32 0.0, %v121
    %123 = vmatmul.bf16.gmra.mxu0 %v86
    %v124 = vpop.f32.mrf.mxu0
    %v125 = vadd.f32 0.0, %v124
    %v126 = vpop.f32.mrf.mxu0
    %v127 = vadd.f32 0.0, %v126
    %128 = vmatmul.bf16.gmra.mxu0 %v89
    %v129 = vpop.f32.mrf.mxu0
    %v130 = vadd.f32 0.0, %v129
    %v131 = vpop.f32.mrf.mxu0
    %v132 = vadd.f32 0.0, %v131
    %133 = vmatmul.bf16.gmra.mxu0 %v92
    %v134 = vpop.f32.mrf.mxu0
    %v135 = vadd.f32 0.0, %v134
    %v136 = vpop.f32.mrf.mxu0
    %v137 = vadd.f32 0.0, %v136
    %138 = vmatmul.bf16.gmra.mxu0 %v95
    %v139 = vpop.f32.mrf.mxu0
    %v140 = vadd.f32 0.0, %v139
    %v141 = vpop.f32.mrf.mxu0
    %v142 = vadd.f32 0.0, %v141
    %143 = vmatmul.bf16.gmra.mxu0 %v98
    %v144 = vpop.f32.mrf.mxu0
    %v145 = vadd.f32 0.0, %v144
    %v146 = vpop.f32.mrf.mxu0
    %v147 = vadd.f32 0.0, %v146
    %148 = vdwg.mxu0
    %v149 = vld [vmem:[%s2] sm:$0x1]
    %v150 = vld [vmem:[%s3] sm:$0x1]
    %vm151 = vcmask 261120
    %v152 = vsel %vm151, %v110, 0.0
    %153 = vadd.xlane.f32.xlu0 %v152
    %v154 = vpop.xlane.xlu0 %153
    %v155 = vsel %vm151, %v112, 0.0
    %156 = vadd.xlane.f32.xlu0 %v155
    %v157 = vpop.xlane.xlu0 %156
    %v158 = vsel %vm151, %v115, 0.0
    %159 = vadd.xlane.f32.xlu0 %v158
    %v160 = vpop.xlane.xlu0 %159
    %v161 = vsel %vm151, %v117, 0.0
    %162 = vadd.xlane.f32.xlu0 %v161
    %v163 = vpop.xlane.xlu0 %162
    %v164 = vsel %vm151, %v120, 0.0
    %165 = vadd.xlane.f32.xlu0 %v164
    %v166 = vpop.xlane.xlu0 %165
    %v167 = vsel %vm151, %v122, 0.0
    %168 = vadd.xlane.f32.xlu0 %v167
    %v169 = vpop.xlane.xlu0 %168
    %v170 = vsel %vm151, %v125, 0.0
    %171 = vadd.xlane.f32.xlu0 %v170
    %v172 = vpop.xlane.xlu0 %171
    %v173 = vsel %vm151, %v127, 0.0
    %174 = vadd.xlane.f32.xlu0 %v173
    %v175 = vpop.xlane.xlu0 %174
    %v176 = vsel %vm151, %v130, 0.0
    %177 = vadd.xlane.f32.xlu0 %v176
    %v178 = vpop.xlane.xlu0 %177
    %v179 = vsel %vm151, %v132, 0.0
    %180 = vadd.xlane.f32.xlu0 %v179
    %v181 = vpop.xlane.xlu0 %180
    %v182 = vsel %vm151, %v135, 0.0
    %183 = vadd.xlane.f32.xlu0 %v182
    %v184 = vpop.xlane.xlu0 %183
    %v185 = vsel %vm151, %v137, 0.0
    %186 = vadd.xlane.f32.xlu0 %v185
    %v187 = vpop.xlane.xlu0 %186
    %v188 = vsel %vm151, %v140, 0.0
    %189 = vadd.xlane.f32.xlu0 %v188
    %v190 = vpop.xlane.xlu0 %189
    %v191 = vsel %vm151, %v142, 0.0
    %192 = vadd.xlane.f32.xlu0 %v191
    %v193 = vpop.xlane.xlu0 %192
    %v194 = vsel %vm151, %v145, 0.0
    %195 = vadd.xlane.f32.xlu0 %v194
    %v196 = vpop.xlane.xlu0 %195
    %v197 = vsel %vm151, %v147, 0.0
    %198 = vadd.xlane.f32.xlu0 %v197
    %v199 = vpop.xlane.xlu0 %198
    %v200 = vmul.f32 %v154, 0.03125
    %v201 = vmul.f32 %v157, 0.03125
    %v202 = vmul.f32 %v160, 0.03125
    %v203 = vmul.f32 %v163, 0.03125
    %v204 = vmul.f32 %v166, 0.03125
    %v205 = vmul.f32 %v169, 0.03125
    %v206 = vmul.f32 %v172, 0.03125
    %v207 = vmul.f32 %v175, 0.03125
    %v208 = vmul.f32 %v178, 0.03125
    %v209 = vmul.f32 %v181, 0.03125
    %v210 = vmul.f32 %v184, 0.03125
    %v211 = vmul.f32 %v187, 0.03125
    %v212 = vmul.f32 %v190, 0.03125
    %v213 = vmul.f32 %v193, 0.03125
    %v214 = vmul.f32 %v196, 0.03125
    %v215 = vmul.f32 %v199, 0.03125
    %v216 = vsub.f32 %v110, %v200
    %v217 = vsub.f32 %v112, %v201
    %v218 = vsub.f32 %v115, %v202
    %v219 = vsub.f32 %v117, %v203
    %v220 = vsub.f32 %v120, %v204
    %v221 = vsub.f32 %v122, %v205
    %v222 = vsub.f32 %v125, %v206
    %v223 = vsub.f32 %v127, %v207
    %v224 = vsub.f32 %v130, %v208
    %v225 = vsub.f32 %v132, %v209
    %v226 = vsub.f32 %v135, %v210
    %v227 = vsub.f32 %v137, %v211
    %v228 = vsub.f32 %v140, %v212
    %v229 = vsub.f32 %v142, %v213
    %v230 = vsub.f32 %v145, %v214
    %v231 = vsub.f32 %v147, %v215
    %v232 = vmul.f32 %v216, %v216
    %v233 = vmul.f32 %v217, %v217
    %v234 = vmul.f32 %v218, %v218
    %v235 = vmul.f32 %v219, %v219
    %v236 = vmul.f32 %v220, %v220
    %v237 = vmul.f32 %v221, %v221
    %v238 = vmul.f32 %v222, %v222
    %v239 = vmul.f32 %v223, %v223
    %v240 = vmul.f32 %v224, %v224
    %v241 = vmul.f32 %v225, %v225
    %v242 = vmul.f32 %v226, %v226
    %v243 = vmul.f32 %v227, %v227
    %v244 = vmul.f32 %v228, %v228
    %v245 = vmul.f32 %v229, %v229
    %v246 = vmul.f32 %v230, %v230
    %v247 = vmul.f32 %v231, %v231
    %v248 = vsel %vm151, %v232, 0.0
    %249 = vadd.xlane.f32.xlu0 %v248
    %v250 = vpop.xlane.xlu0 %249
    %v251 = vsel %vm151, %v233, 0.0
    %252 = vadd.xlane.f32.xlu0 %v251
    %v253 = vpop.xlane.xlu0 %252
    %v254 = vsel %vm151, %v234, 0.0
    %255 = vadd.xlane.f32.xlu0 %v254
    %v256 = vpop.xlane.xlu0 %255
    %v257 = vsel %vm151, %v235, 0.0
    %258 = vadd.xlane.f32.xlu0 %v257
    %v259 = vpop.xlane.xlu0 %258
    %v260 = vsel %vm151, %v236, 0.0
    %261 = vadd.xlane.f32.xlu0 %v260
    %v262 = vpop.xlane.xlu0 %261
    %v263 = vsel %vm151, %v237, 0.0
    %264 = vadd.xlane.f32.xlu0 %v263
    %v265 = vpop.xlane.xlu0 %264
    %v266 = vsel %vm151, %v238, 0.0
    %267 = vadd.xlane.f32.xlu0 %v266
    %v268 = vpop.xlane.xlu0 %267
    %v269 = vsel %vm151, %v239, 0.0
    %270 = vadd.xlane.f32.xlu0 %v269
    %v271 = vpop.xlane.xlu0 %270
    %v272 = vsel %vm151, %v240, 0.0
    %273 = vadd.xlane.f32.xlu0 %v272
    %v274 = vpop.xlane.xlu0 %273
    %v275 = vsel %vm151, %v241, 0.0
    %276 = vadd.xlane.f32.xlu0 %v275
    %v277 = vpop.xlane.xlu0 %276
    %v278 = vsel %vm151, %v242, 0.0
    %279 = vadd.xlane.f32.xlu0 %v278
    %v280 = vpop.xlane.xlu0 %279
    %v281 = vsel %vm151, %v243, 0.0
    %282 = vadd.xlane.f32.xlu0 %v281
    %v283 = vpop.xlane.xlu0 %282
    %v284 = vsel %vm151, %v244, 0.0
    %285 = vadd.xlane.f32.xlu0 %v284
    %v286 = vpop.xlane.xlu0 %285
    %v287 = vsel %vm151, %v245, 0.0
    %288 = vadd.xlane.f32.xlu0 %v287
    %v289 = vpop.xlane.xlu0 %288
    %v290 = vsel %vm151, %v246, 0.0
    %291 = vadd.xlane.f32.xlu0 %v290
    %v292 = vpop.xlane.xlu0 %291
    %v293 = vsel %vm151, %v247, 0.0
    %294 = vadd.xlane.f32.xlu0 %v293
    %v295 = vpop.xlane.xlu0 %294
    %v296 = vmul.f32 %v250, 0.03125
    %v297 = vmul.f32 %v253, 0.03125
    %v298 = vmul.f32 %v256, 0.03125
    %v299 = vmul.f32 %v259, 0.03125
    %v300 = vmul.f32 %v262, 0.03125
    %v301 = vmul.f32 %v265, 0.03125
    %v302 = vmul.f32 %v268, 0.03125
    %v303 = vmul.f32 %v271, 0.03125
    %v304 = vmul.f32 %v274, 0.03125
    %v305 = vmul.f32 %v277, 0.03125
    %v306 = vmul.f32 %v280, 0.03125
    %v307 = vmul.f32 %v283, 0.03125
    %v308 = vmul.f32 %v286, 0.03125
    %v309 = vmul.f32 %v289, 0.03125
    %v310 = vmul.f32 %v292, 0.03125
    %v311 = vmul.f32 %v295, 0.03125
    %v312 = vadd.f32 %v296, 1e-05
    %v313 = vadd.f32 %v297, 1e-05
    %v314 = vadd.f32 %v298, 1e-05
    %v315 = vadd.f32 %v299, 1e-05
    %v316 = vadd.f32 %v300, 1e-05
    %v317 = vadd.f32 %v301, 1e-05
    %v318 = vadd.f32 %v302, 1e-05
    %v319 = vadd.f32 %v303, 1e-05
    %v320 = vadd.f32 %v304, 1e-05
    %v321 = vadd.f32 %v305, 1e-05
    %v322 = vadd.f32 %v306, 1e-05
    %v323 = vadd.f32 %v307, 1e-05
    %v324 = vadd.f32 %v308, 1e-05
    %v325 = vadd.f32 %v309, 1e-05
    %v326 = vadd.f32 %v310, 1e-05
    %v327 = vadd.f32 %v311, 1e-05
    %v328 = vrsqrt.pop %v312
    %v329 = vmul.f32 %v328, %v312
    %v330 = vmul.f32 %v329, %v328
    %v331 = vmul.f32 0.5, %v330
    %v332 = vsub.f32 1.5, %v331
    %v333 = vmul.f32 %v328, %v332
    %vm334 = vweird.f32 %v312
    %vm335 = vweird.f32 %v328
    %vm336 = vmor %vm334, %vm335
    %v337 = vsel %vm336, %v328, %v333
    %v338 = vrsqrt.pop %v313
    %v339 = vmul.f32 %v338, %v313
    %v340 = vmul.f32 %v339, %v338
    %v341 = vmul.f32 0.5, %v340
    %v342 = vsub.f32 1.5, %v341
    %v343 = vmul.f32 %v338, %v342
    %vm344 = vweird.f32 %v313
    %vm345 = vweird.f32 %v338
    %vm346 = vmor %vm344, %vm345
    %v347 = vsel %vm346, %v338, %v343
    %v348 = vrsqrt.pop %v314
    %v349 = vmul.f32 %v348, %v314
    %v350 = vmul.f32 %v349, %v348
    %v351 = vmul.f32 0.5, %v350
    %v352 = vsub.f32 1.5, %v351
    %v353 = vmul.f32 %v348, %v352
    %vm354 = vweird.f32 %v314
    %vm355 = vweird.f32 %v348
    %vm356 = vmor %vm354, %vm355
    %v357 = vsel %vm356, %v348, %v353
    %v358 = vrsqrt.pop %v315
    %v359 = vmul.f32 %v358, %v315
    %v360 = vmul.f32 %v359, %v358
    %v361 = vmul.f32 0.5, %v360
    %v362 = vsub.f32 1.5, %v361
    %v363 = vmul.f32 %v358, %v362
    %vm364 = vweird.f32 %v315
    %vm365 = vweird.f32 %v358
    %vm366 = vmor %vm364, %vm365
    %v367 = vsel %vm366, %v358, %v363
    %v368 = vrsqrt.pop %v316
    %v369 = vmul.f32 %v368, %v316
    %v370 = vmul.f32 %v369, %v368
    %v371 = vmul.f32 0.5, %v370
    %v372 = vsub.f32 1.5, %v371
    %v373 = vmul.f32 %v368, %v372
    %vm374 = vweird.f32 %v316
    %vm375 = vweird.f32 %v368
    %vm376 = vmor %vm374, %vm375
    %v377 = vsel %vm376, %v368, %v373
    %v378 = vrsqrt.pop %v317
    %v379 = vmul.f32 %v378, %v317
    %v380 = vmul.f32 %v379, %v378
    %v381 = vmul.f32 0.5, %v380
    %v382 = vsub.f32 1.5, %v381
    %v383 = vmul.f32 %v378, %v382
    %vm384 = vweird.f32 %v317
    %vm385 = vweird.f32 %v378
    %vm386 = vmor %vm384, %vm385
    %v387 = vsel %vm386, %v378, %v383
    %v388 = vrsqrt.pop %v318
    %v389 = vmul.f32 %v388, %v318
    %v390 = vmul.f32 %v389, %v388
    %v391 = vmul.f32 0.5, %v390
    %v392 = vsub.f32 1.5, %v391
    %v393 = vmul.f32 %v388, %v392
    %vm394 = vweird.f32 %v318
    %vm395 = vweird.f32 %v388
    %vm396 = vmor %vm394, %vm395
    %v397 = vsel %vm396, %v388, %v393
    %v398 = vrsqrt.pop %v319
    %v399 = vmul.f32 %v398, %v319
    %v400 = vmul.f32 %v399, %v398
    %v401 = vmul.f32 0.5, %v400
    %v402 = vsub.f32 1.5, %v401
    %v403 = vmul.f32 %v398, %v402
    %vm404 = vweird.f32 %v319
    %vm405 = vweird.f32 %v398
    %vm406 = vmor %vm404, %vm405
    %v407 = vsel %vm406, %v398, %v403
    %v408 = vrsqrt.pop %v320
    %v409 = vmul.f32 %v408, %v320
    %v410 = vmul.f32 %v409, %v408
    %v411 = vmul.f32 0.5, %v410
    %v412 = vsub.f32 1.5, %v411
    %v413 = vmul.f32 %v408, %v412
    %vm414 = vweird.f32 %v320
    %vm415 = vweird.f32 %v408
    %vm416 = vmor %vm414, %vm415
    %v417 = vsel %vm416, %v408, %v413
    %v418 = vrsqrt.pop %v321
    %v419 = vmul.f32 %v418, %v321
    %v420 = vmul.f32 %v419, %v418
    %v421 = vmul.f32 0.5, %v420
    %v422 = vsub.f32 1.5, %v421
    %v423 = vmul.f32 %v418, %v422
    %vm424 = vweird.f32 %v321
    %vm425 = vweird.f32 %v418
    %vm426 = vmor %vm424, %vm425
    %v427 = vsel %vm426, %v418, %v423
    %v428 = vrsqrt.pop %v322
    %v429 = vmul.f32 %v428, %v322
    %v430 = vmul.f32 %v429, %v428
    %v431 = vmul.f32 0.5, %v430
    %v432 = vsub.f32 1.5, %v431
    %v433 = vmul.f32 %v428, %v432
    %vm434 = vweird.f32 %v322
    %vm435 = vweird.f32 %v428
    %vm436 = vmor %vm434, %vm435
    %v437 = vsel %vm436, %v428, %v433
    %v438 = vrsqrt.pop %v323
    %v439 = vmul.f32 %v438, %v323
    %v440 = vmul.f32 %v439, %v438
    %v441 = vmul.f32 0.5, %v440
    %v442 = vsub.f32 1.5, %v441
    %v443 = vmul.f32 %v438, %v442
    %vm444 = vweird.f32 %v323
    %vm445 = vweird.f32 %v438
    %vm446 = vmor %vm444, %vm445
    %v447 = vsel %vm446, %v438, %v443
    %v448 = vrsqrt.pop %v324
    %v449 = vmul.f32 %v448, %v324
    %v450 = vmul.f32 %v449, %v448
    %v451 = vmul.f32 0.5, %v450
    %v452 = vsub.f32 1.5, %v451
    %v453 = vmul.f32 %v448, %v452
    %vm454 = vweird.f32 %v324
    %vm455 = vweird.f32 %v448
    %vm456 = vmor %vm454, %vm455
    %v457 = vsel %vm456, %v448, %v453
    %v458 = vrsqrt.pop %v325
    %v459 = vmul.f32 %v458, %v325
    %v460 = vmul.f32 %v459, %v458
    %v461 = vmul.f32 0.5, %v460
    %v462 = vsub.f32 1.5, %v461
    %v463 = vmul.f32 %v458, %v462
    %vm464 = vweird.f32 %v325
    %vm465 = vweird.f32 %v458
    %vm466 = vmor %vm464, %vm465
    %v467 = vsel %vm466, %v458, %v463
    %v468 = vrsqrt.pop %v326
    %v469 = vmul.f32 %v468, %v326
    %v470 = vmul.f32 %v469, %v468
    %v471 = vmul.f32 0.5, %v470
    %v472 = vsub.f32 1.5, %v471
    %v473 = vmul.f32 %v468, %v472
    %vm474 = vweird.f32 %v326
    %vm475 = vweird.f32 %v468
    %vm476 = vmor %vm474, %vm475
    %v477 = vsel %vm476, %v468, %v473
    %v478 = vrsqrt.pop %v327
    %v479 = vmul.f32 %v478, %v327
    %v480 = vmul.f32 %v479, %v478
    %v481 = vmul.f32 0.5, %v480
    %v482 = vsub.f32 1.5, %v481
    %v483 = vmul.f32 %v478, %v482
    %vm484 = vweird.f32 %v327
    %vm485 = vweird.f32 %v478
    %vm486 = vmor %vm484, %vm485
    %v487 = vsel %vm486, %v478, %v483
    %v488 = vmul.f32 %v216, %v337
    %v489 = vmul.f32 %v217, %v347
    %v490 = vmul.f32 %v218, %v357
    %v491 = vmul.f32 %v219, %v367
    %v492 = vmul.f32 %v220, %v377
    %v493 = vmul.f32 %v221, %v387
    %v494 = vmul.f32 %v222, %v397
    %v495 = vmul.f32 %v223, %v407
    %v496 = vmul.f32 %v224, %v417
    %v497 = vmul.f32 %v225, %v427
    %v498 = vmul.f32 %v226, %v437
    %v499 = vmul.f32 %v227, %v447
    %v500 = vmul.f32 %v228, %v457
    %v501 = vmul.f32 %v229, %v467
    %v502 = vmul.f32 %v230, %v477
    %v503 = vmul.f32 %v231, %v487
    %520 = vrot.lane.b32.xlu0 %v110, 96
    %v521 = vpop.permute.xlu0 %520
    %522 = vrot.lane.b32.xlu0 %v112, 96
    %v523 = vpop.permute.xlu0 %522
    %524 = vrot.lane.b32.xlu0 %v115, 96
    %v525 = vpop.permute.xlu0 %524
    %526 = vrot.lane.b32.xlu0 %v117, 96
    %v527 = vpop.permute.xlu0 %526
    %528 = vrot.lane.b32.xlu0 %v120, 96
    %v529 = vpop.permute.xlu0 %528
    %530 = vrot.lane.b32.xlu0 %v122, 96
    %v531 = vpop.permute.xlu0 %530
    %532 = vrot.lane.b32.xlu0 %v125, 96
    %v533 = vpop.permute.xlu0 %532
    %534 = vrot.lane.b32.xlu0 %v127, 96
    %v535 = vpop.permute.xlu0 %534
    %536 = vrot.lane.b32.xlu0 %v130, 96
    %v537 = vpop.permute.xlu0 %536
    %538 = vrot.lane.b32.xlu0 %v132, 96
    %v539 = vpop.permute.xlu0 %538
    %540 = vrot.lane.b32.xlu0 %v135, 96
    %v541 = vpop.permute.xlu0 %540
    %542 = vrot.lane.b32.xlu0 %v137, 96
    %v543 = vpop.permute.xlu0 %542
    %544 = vrot.lane.b32.xlu0 %v140, 96
    %v545 = vpop.permute.xlu0 %544
    %546 = vrot.lane.b32.xlu0 %v142, 96
    %v547 = vpop.permute.xlu0 %546
    %548 = vrot.lane.b32.xlu0 %v145, 96
    %v549 = vpop.permute.xlu0 %548
    %550 = vrot.lane.b32.xlu0 %v147, 96
    %v551 = vpop.permute.xlu0 %550
    %v568 = vsel %vm151, %v521, 0.0
    %569 = vadd.xlane.f32.xlu0 %v568
    %v570 = vpop.xlane.xlu0 %569
    %v571 = vsel %vm151, %v523, 0.0
    %572 = vadd.xlane.f32.xlu0 %v571
    %v573 = vpop.xlane.xlu0 %572
    %v574 = vsel %vm151, %v525, 0.0
    %575 = vadd.xlane.f32.xlu0 %v574
    %v576 = vpop.xlane.xlu0 %575
    %v577 = vsel %vm151, %v527, 0.0
    %578 = vadd.xlane.f32.xlu0 %v577
    %v579 = vpop.xlane.xlu0 %578
    %v580 = vsel %vm151, %v529, 0.0
    %581 = vadd.xlane.f32.xlu0 %v580
    %v582 = vpop.xlane.xlu0 %581
    %v583 = vsel %vm151, %v531, 0.0
    %584 = vadd.xlane.f32.xlu0 %v583
    %v585 = vpop.xlane.xlu0 %584
    %v586 = vsel %vm151, %v533, 0.0
    %587 = vadd.xlane.f32.xlu0 %v586
    %v588 = vpop.xlane.xlu0 %587
    %v589 = vsel %vm151, %v535, 0.0
    %590 = vadd.xlane.f32.xlu0 %v589
    %v591 = vpop.xlane.xlu0 %590
    %v592 = vsel %vm151, %v537, 0.0
    %593 = vadd.xlane.f32.xlu0 %v592
    %v594 = vpop.xlane.xlu0 %593
    %v595 = vsel %vm151, %v539, 0.0
    %596 = vadd.xlane.f32.xlu0 %v595
    %v597 = vpop.xlane.xlu0 %596
    %v598 = vsel %vm151, %v541, 0.0
    %599 = vadd.xlane.f32.xlu0 %v598
    %v600 = vpop.xlane.xlu0 %599
    %v601 = vsel %vm151, %v543, 0.0
    %602 = vadd.xlane.f32.xlu0 %v601
    %v603 = vpop.xlane.xlu0 %602
    %v604 = vsel %vm151, %v545, 0.0
    %605 = vadd.xlane.f32.xlu0 %v604
    %v606 = vpop.xlane.xlu0 %605
    %v607 = vsel %vm151, %v547, 0.0
    %608 = vadd.xlane.f32.xlu0 %v607
    %v609 = vpop.xlane.xlu0 %608
    %v610 = vsel %vm151, %v549, 0.0
    %611 = vadd.xlane.f32.xlu0 %v610
    %v612 = vpop.xlane.xlu0 %611
    %v613 = vsel %vm151, %v551, 0.0
    %614 = vadd.xlane.f32.xlu0 %v613
    %v615 = vpop.xlane.xlu0 %614
    %v616 = vmul.f32 %v570, 0.03125
    %v617 = vmul.f32 %v573, 0.03125
    %v618 = vmul.f32 %v576, 0.03125
    %v619 = vmul.f32 %v579, 0.03125
    %v620 = vmul.f32 %v582, 0.03125
    %v621 = vmul.f32 %v585, 0.03125
    %v622 = vmul.f32 %v588, 0.03125
    %v623 = vmul.f32 %v591, 0.03125
    %v624 = vmul.f32 %v594, 0.03125
    %v625 = vmul.f32 %v597, 0.03125
    %v626 = vmul.f32 %v600, 0.03125
    %v627 = vmul.f32 %v603, 0.03125
    %v628 = vmul.f32 %v606, 0.03125
    %v629 = vmul.f32 %v609, 0.03125
    %v630 = vmul.f32 %v612, 0.03125
    %v631 = vmul.f32 %v615, 0.03125
    %v632 = vsub.f32 %v110, %v616
    %v633 = vsub.f32 %v112, %v617
    %v634 = vsub.f32 %v115, %v618
    %v635 = vsub.f32 %v117, %v619
    %v636 = vsub.f32 %v120, %v620
    %v637 = vsub.f32 %v122, %v621
    %v638 = vsub.f32 %v125, %v622
    %v639 = vsub.f32 %v127, %v623
    %v640 = vsub.f32 %v130, %v624
    %v641 = vsub.f32 %v132, %v625
    %v642 = vsub.f32 %v135, %v626
    %v643 = vsub.f32 %v137, %v627
    %v644 = vsub.f32 %v140, %v628
    %v645 = vsub.f32 %v142, %v629
    %v646 = vsub.f32 %v145, %v630
    %v647 = vsub.f32 %v147, %v631
    %v648 = vmul.f32 %v632, %v632
    %v649 = vmul.f32 %v633, %v633
    %v650 = vmul.f32 %v634, %v634
    %v651 = vmul.f32 %v635, %v635
    %v652 = vmul.f32 %v636, %v636
    %v653 = vmul.f32 %v637, %v637
    %v654 = vmul.f32 %v638, %v638
    %v655 = vmul.f32 %v639, %v639
    %v656 = vmul.f32 %v640, %v640
    %v657 = vmul.f32 %v641, %v641
    %v658 = vmul.f32 %v642, %v642
    %v659 = vmul.f32 %v643, %v643
    %v660 = vmul.f32 %v644, %v644
    %v661 = vmul.f32 %v645, %v645
    %v662 = vmul.f32 %v646, %v646
    %v663 = vmul.f32 %v647, %v647
    %680 = vrot.lane.b32.xlu0 %v648, 96
    %v681 = vpop.permute.xlu0 %680
    %682 = vrot.lane.b32.xlu0 %v649, 96
    %v683 = vpop.permute.xlu0 %682
    %684 = vrot.lane.b32.xlu0 %v650, 96
    %v685 = vpop.permute.xlu0 %684
    %686 = vrot.lane.b32.xlu0 %v651, 96
    %v687 = vpop.permute.xlu0 %686
    %688 = vrot.lane.b32.xlu0 %v652, 96
    %v689 = vpop.permute.xlu0 %688
    %690 = vrot.lane.b32.xlu0 %v653, 96
    %v691 = vpop.permute.xlu0 %690
    %692 = vrot.lane.b32.xlu0 %v654, 96
    %v693 = vpop.permute.xlu0 %692
    %694 = vrot.lane.b32.xlu0 %v655, 96
    %v695 = vpop.permute.xlu0 %694
    %696 = vrot.lane.b32.xlu0 %v656, 96
    %v697 = vpop.permute.xlu0 %696
    %698 = vrot.lane.b32.xlu0 %v657, 96
    %v699 = vpop.permute.xlu0 %698
    %700 = vrot.lane.b32.xlu0 %v658, 96
    %v701 = vpop.permute.xlu0 %700
    %702 = vrot.lane.b32.xlu0 %v659, 96
    %v703 = vpop.permute.xlu0 %702
    %704 = vrot.lane.b32.xlu0 %v660, 96
    %v705 = vpop.permute.xlu0 %704
    %706 = vrot.lane.b32.xlu0 %v661, 96
    %v707 = vpop.permute.xlu0 %706
    %708 = vrot.lane.b32.xlu0 %v662, 96
    %v709 = vpop.permute.xlu0 %708
    %710 = vrot.lane.b32.xlu0 %v663, 96
    %v711 = vpop.permute.xlu0 %710
    %v728 = vsel %vm151, %v681, 0.0
    %729 = vadd.xlane.f32.xlu0 %v728
    %v730 = vpop.xlane.xlu0 %729
    %v731 = vsel %vm151, %v683, 0.0
    %732 = vadd.xlane.f32.xlu0 %v731
    %v733 = vpop.xlane.xlu0 %732
    %v734 = vsel %vm151, %v685, 0.0
    %735 = vadd.xlane.f32.xlu0 %v734
    %v736 = vpop.xlane.xlu0 %735
    %v737 = vsel %vm151, %v687, 0.0
    %738 = vadd.xlane.f32.xlu0 %v737
    %v739 = vpop.xlane.xlu0 %738
    %v740 = vsel %vm151, %v689, 0.0
    %741 = vadd.xlane.f32.xlu0 %v740
    %v742 = vpop.xlane.xlu0 %741
    %v743 = vsel %vm151, %v691, 0.0
    %744 = vadd.xlane.f32.xlu0 %v743
    %v745 = vpop.xlane.xlu0 %744
    %v746 = vsel %vm151, %v693, 0.0
    %747 = vadd.xlane.f32.xlu0 %v746
    %v748 = vpop.xlane.xlu0 %747
    %v749 = vsel %vm151, %v695, 0.0
    %750 = vadd.xlane.f32.xlu0 %v749
    %v751 = vpop.xlane.xlu0 %750
    %v752 = vsel %vm151, %v697, 0.0
    %753 = vadd.xlane.f32.xlu0 %v752
    %v754 = vpop.xlane.xlu0 %753
    %v755 = vsel %vm151, %v699, 0.0
    %756 = vadd.xlane.f32.xlu0 %v755
    %v757 = vpop.xlane.xlu0 %756
    %v758 = vsel %vm151, %v701, 0.0
    %759 = vadd.xlane.f32.xlu0 %v758
    %v760 = vpop.xlane.xlu0 %759
    %v761 = vsel %vm151, %v703, 0.0
    %762 = vadd.xlane.f32.xlu0 %v761
    %v763 = vpop.xlane.xlu0 %762
    %v764 = vsel %vm151, %v705, 0.0
    %765 = vadd.xlane.f32.xlu0 %v764
    %v766 = vpop.xlane.xlu0 %765
    %v767 = vsel %vm151, %v707, 0.0
    %768 = vadd.xlane.f32.xlu0 %v767
    %v769 = vpop.xlane.xlu0 %768
    %v770 = vsel %vm151, %v709, 0.0
    %771 = vadd.xlane.f32.xlu0 %v770
    %v772 = vpop.xlane.xlu0 %771
    %v773 = vsel %vm151, %v711, 0.0
    %774 = vadd.xlane.f32.xlu0 %v773
    %v775 = vpop.xlane.xlu0 %774
    %v776 = vmul.f32 %v730, 0.03125
    %v777 = vmul.f32 %v733, 0.03125
    %v778 = vmul.f32 %v736, 0.03125
    %v779 = vmul.f32 %v739, 0.03125
    %v780 = vmul.f32 %v742, 0.03125
    %v781 = vmul.f32 %v745, 0.03125
    %v782 = vmul.f32 %v748, 0.03125
    %v783 = vmul.f32 %v751, 0.03125
    %v784 = vmul.f32 %v754, 0.03125
    %v785 = vmul.f32 %v757, 0.03125
    %v786 = vmul.f32 %v760, 0.03125
    %v787 = vmul.f32 %v763, 0.03125
    %v788 = vmul.f32 %v766, 0.03125
    %v789 = vmul.f32 %v769, 0.03125
    %v790 = vmul.f32 %v772, 0.03125
    %v791 = vmul.f32 %v775, 0.03125
    %v792 = vadd.f32 %v776, 1e-05
    %v793 = vadd.f32 %v777, 1e-05
    %v794 = vadd.f32 %v778, 1e-05
    %v795 = vadd.f32 %v779, 1e-05
    %v796 = vadd.f32 %v780, 1e-05
    %v797 = vadd.f32 %v781, 1e-05
    %v798 = vadd.f32 %v782, 1e-05
    %v799 = vadd.f32 %v783, 1e-05
    %v800 = vadd.f32 %v784, 1e-05
    %v801 = vadd.f32 %v785, 1e-05
    %v802 = vadd.f32 %v786, 1e-05
    %v803 = vadd.f32 %v787, 1e-05
    %v804 = vadd.f32 %v788, 1e-05
    %v805 = vadd.f32 %v789, 1e-05
    %v806 = vadd.f32 %v790, 1e-05
    %v807 = vadd.f32 %v791, 1e-05
    %v808 = vrsqrt.pop %v792
    %v809 = vmul.f32 %v808, %v792
    %v810 = vmul.f32 %v809, %v808
    %v811 = vmul.f32 0.5, %v810
    %v812 = vsub.f32 1.5, %v811
    %v813 = vmul.f32 %v808, %v812
    %vm814 = vweird.f32 %v792
    %vm815 = vweird.f32 %v808
    %vm816 = vmor %vm814, %vm815
    %v817 = vsel %vm816, %v808, %v813
    %v818 = vrsqrt.pop %v793
    %v819 = vmul.f32 %v818, %v793
    %v820 = vmul.f32 %v819, %v818
    %v821 = vmul.f32 0.5, %v820
    %v822 = vsub.f32 1.5, %v821
    %v823 = vmul.f32 %v818, %v822
    %vm824 = vweird.f32 %v793
    %vm825 = vweird.f32 %v818
    %vm826 = vmor %vm824, %vm825
    %v827 = vsel %vm826, %v818, %v823
    %v828 = vrsqrt.pop %v794
    %v829 = vmul.f32 %v828, %v794
    %v830 = vmul.f32 %v829, %v828
    %v831 = vmul.f32 0.5, %v830
    %v832 = vsub.f32 1.5, %v831
    %v833 = vmul.f32 %v828, %v832
    %vm834 = vweird.f32 %v794
    %vm835 = vweird.f32 %v828
    %vm836 = vmor %vm834, %vm835
    %v837 = vsel %vm836, %v828, %v833
    %v838 = vrsqrt.pop %v795
    %v839 = vmul.f32 %v838, %v795
    %v840 = vmul.f32 %v839, %v838
    %v841 = vmul.f32 0.5, %v840
    %v842 = vsub.f32 1.5, %v841
    %v843 = vmul.f32 %v838, %v842
    %vm844 = vweird.f32 %v795
    %vm845 = vweird.f32 %v838
    %vm846 = vmor %vm844, %vm845
    %v847 = vsel %vm846, %v838, %v843
    %v848 = vrsqrt.pop %v796
    %v849 = vmul.f32 %v848, %v796
    %v850 = vmul.f32 %v849, %v848
    %v851 = vmul.f32 0.5, %v850
    %v852 = vsub.f32 1.5, %v851
    %v853 = vmul.f32 %v848, %v852
    %vm854 = vweird.f32 %v796
    %vm855 = vweird.f32 %v848
    %vm856 = vmor %vm854, %vm855
    %v857 = vsel %vm856, %v848, %v853
    %v858 = vrsqrt.pop %v797
    %v859 = vmul.f32 %v858, %v797
    %v860 = vmul.f32 %v859, %v858
    %v861 = vmul.f32 0.5, %v860
    %v862 = vsub.f32 1.5, %v861
    %v863 = vmul.f32 %v858, %v862
    %vm864 = vweird.f32 %v797
    %vm865 = vweird.f32 %v858
    %vm866 = vmor %vm864, %vm865
    %v867 = vsel %vm866, %v858, %v863
    %v868 = vrsqrt.pop %v798
    %v869 = vmul.f32 %v868, %v798
    %v870 = vmul.f32 %v869, %v868
    %v871 = vmul.f32 0.5, %v870
    %v872 = vsub.f32 1.5, %v871
    %v873 = vmul.f32 %v868, %v872
    %vm874 = vweird.f32 %v798
    %vm875 = vweird.f32 %v868
    %vm876 = vmor %vm874, %vm875
    %v877 = vsel %vm876, %v868, %v873
    %v878 = vrsqrt.pop %v799
    %v879 = vmul.f32 %v878, %v799
    %v880 = vmul.f32 %v879, %v878
    %v881 = vmul.f32 0.5, %v880
    %v882 = vsub.f32 1.5, %v881
    %v883 = vmul.f32 %v878, %v882
    %vm884 = vweird.f32 %v799
    %vm885 = vweird.f32 %v878
    %vm886 = vmor %vm884, %vm885
    %v887 = vsel %vm886, %v878, %v883
    %v888 = vrsqrt.pop %v800
    %v889 = vmul.f32 %v888, %v800
    %v890 = vmul.f32 %v889, %v888
    %v891 = vmul.f32 0.5, %v890
    %v892 = vsub.f32 1.5, %v891
    %v893 = vmul.f32 %v888, %v892
    %vm894 = vweird.f32 %v800
    %vm895 = vweird.f32 %v888
    %vm896 = vmor %vm894, %vm895
    %v897 = vsel %vm896, %v888, %v893
    %v898 = vrsqrt.pop %v801
    %v899 = vmul.f32 %v898, %v801
    %v900 = vmul.f32 %v899, %v898
    %v901 = vmul.f32 0.5, %v900
    %v902 = vsub.f32 1.5, %v901
    %v903 = vmul.f32 %v898, %v902
    %vm904 = vweird.f32 %v801
    %vm905 = vweird.f32 %v898
    %vm906 = vmor %vm904, %vm905
    %v907 = vsel %vm906, %v898, %v903
    %v908 = vrsqrt.pop %v802
    %v909 = vmul.f32 %v908, %v802
    %v910 = vmul.f32 %v909, %v908
    %v911 = vmul.f32 0.5, %v910
    %v912 = vsub.f32 1.5, %v911
    %v913 = vmul.f32 %v908, %v912
    %vm914 = vweird.f32 %v802
    %vm915 = vweird.f32 %v908
    %vm916 = vmor %vm914, %vm915
    %v917 = vsel %vm916, %v908, %v913
    %v918 = vrsqrt.pop %v803
    %v919 = vmul.f32 %v918, %v803
    %v920 = vmul.f32 %v919, %v918
    %v921 = vmul.f32 0.5, %v920
    %v922 = vsub.f32 1.5, %v921
    %v923 = vmul.f32 %v918, %v922
    %vm924 = vweird.f32 %v803
    %vm925 = vweird.f32 %v918
    %vm926 = vmor %vm924, %vm925
    %v927 = vsel %vm926, %v918, %v923
    %v928 = vrsqrt.pop %v804
    %v929 = vmul.f32 %v928, %v804
    %v930 = vmul.f32 %v929, %v928
    %v931 = vmul.f32 0.5, %v930
    %v932 = vsub.f32 1.5, %v931
    %v933 = vmul.f32 %v928, %v932
    %vm934 = vweird.f32 %v804
    %vm935 = vweird.f32 %v928
    %vm936 = vmor %vm934, %vm935
    %v937 = vsel %vm936, %v928, %v933
    %v938 = vrsqrt.pop %v805
    %v939 = vmul.f32 %v938, %v805
    %v940 = vmul.f32 %v939, %v938
    %v941 = vmul.f32 0.5, %v940
    %v942 = vsub.f32 1.5, %v941
    %v943 = vmul.f32 %v938, %v942
    %vm944 = vweird.f32 %v805
    %vm945 = vweird.f32 %v938
    %vm946 = vmor %vm944, %vm945
    %v947 = vsel %vm946, %v938, %v943
    %v948 = vrsqrt.pop %v806
    %v949 = vmul.f32 %v948, %v806
    %v950 = vmul.f32 %v949, %v948
    %v951 = vmul.f32 0.5, %v950
    %v952 = vsub.f32 1.5, %v951
    %v953 = vmul.f32 %v948, %v952
    %vm954 = vweird.f32 %v806
    %vm955 = vweird.f32 %v948
    %vm956 = vmor %vm954, %vm955
    %v957 = vsel %vm956, %v948, %v953
    %v958 = vrsqrt.pop %v807
    %v959 = vmul.f32 %v958, %v807
    %v960 = vmul.f32 %v959, %v958
    %v961 = vmul.f32 0.5, %v960
    %v962 = vsub.f32 1.5, %v961
    %v963 = vmul.f32 %v958, %v962
    %vm964 = vweird.f32 %v807
    %vm965 = vweird.f32 %v958
    %vm966 = vmor %vm964, %vm965
    %v967 = vsel %vm966, %v958, %v963
    %v968 = vmul.f32 %v632, %v817
    %v969 = vmul.f32 %v633, %v827
    %v970 = vmul.f32 %v634, %v837
    %v971 = vmul.f32 %v635, %v847
    %v972 = vmul.f32 %v636, %v857
    %v973 = vmul.f32 %v637, %v867
    %v974 = vmul.f32 %v638, %v877
    %v975 = vmul.f32 %v639, %v887
    %v976 = vmul.f32 %v640, %v897
    %v977 = vmul.f32 %v641, %v907
    %v978 = vmul.f32 %v642, %v917
    %v979 = vmul.f32 %v643, %v927
    %v980 = vmul.f32 %v644, %v937
    %v981 = vmul.f32 %v645, %v947
    %v982 = vmul.f32 %v646, %v957
    %v983 = vmul.f32 %v647, %v967
    %v984 = vsel %vm151, %v488, %v968
    %v985 = vsel %vm151, %v489, %v969
    %v986 = vsel %vm151, %v490, %v970
    %v987 = vsel %vm151, %v491, %v971
    %v988 = vsel %vm151, %v492, %v972
    %v989 = vsel %vm151, %v493, %v973
    %v990 = vsel %vm151, %v494, %v974
    %v991 = vsel %vm151, %v495, %v975
    %v992 = vsel %vm151, %v496, %v976
    %v993 = vsel %vm151, %v497, %v977
    %v994 = vsel %vm151, %v498, %v978
    %v995 = vsel %vm151, %v499, %v979
    %v996 = vsel %vm151, %v500, %v980
    %v997 = vsel %vm151, %v501, %v981
    %v998 = vsel %vm151, %v502, %v982
    %v999 = vsel %vm151, %v503, %v983
    %v1001 = vperm.slane %v149, 0
    %v1003 = vmul.f32 %v984, %v1001
    %v1004 = vmul.f32 %v985, %v1001
    %v1005 = vmul.f32 %v986, %v1001
    %v1006 = vmul.f32 %v987, %v1001
    %v1007 = vmul.f32 %v988, %v1001
    %v1008 = vmul.f32 %v989, %v1001
    %v1009 = vmul.f32 %v990, %v1001
    %v1010 = vmul.f32 %v991, %v1001
    %v1011 = vmul.f32 %v992, %v1001
    %v1012 = vmul.f32 %v993, %v1001
    %v1013 = vmul.f32 %v994, %v1001
    %v1014 = vmul.f32 %v995, %v1001
    %v1015 = vmul.f32 %v996, %v1001
    %v1016 = vmul.f32 %v997, %v1001
    %v1017 = vmul.f32 %v998, %v1001
    %v1018 = vmul.f32 %v999, %v1001
    %v1020 = vperm.slane %v150, 0
    %v1022 = vadd.f32 %v1003, %v1020
    %v1023 = vadd.f32 %v1004, %v1020
    %v1024 = vadd.f32 %v1005, %v1020
    %v1025 = vadd.f32 %v1006, %v1020
    %v1026 = vadd.f32 %v1007, %v1020
    %v1027 = vadd.f32 %v1008, %v1020
    %v1028 = vadd.f32 %v1009, %v1020
    %v1029 = vadd.f32 %v1010, %v1020
    %v1030 = vadd.f32 %v1011, %v1020
    %v1031 = vadd.f32 %v1012, %v1020
    %v1032 = vadd.f32 %v1013, %v1020
    %v1033 = vadd.f32 %v1014, %v1020
    %v1034 = vadd.f32 %v1015, %v1020
    %v1035 = vadd.f32 %v1016, %v1020
    %v1036 = vadd.f32 %v1017, %v1020
    %v1037 = vadd.f32 %v1018, %v1020
    %1038 = vst.msk [vmem:[#allocation2] sm:$0xff] %vm75, %v1022
    %1039 = vst.msk [vmem:[#allocation2 + $0x10] sm:$0xff] %vm75, %v1023
    %1040 = vst.msk [vmem:[#allocation2 + $0x20] sm:$0xff] %vm75, %v1024
    %1041 = vst.msk [vmem:[#allocation2 + $0x30] sm:$0xff] %vm75, %v1025
    %1042 = vst.msk [vmem:[#allocation2 + $0x40] sm:$0xff] %vm75, %v1026
    %1043 = vst.msk [vmem:[#allocation2 + $0x50] sm:$0xff] %vm75, %v1027
    %1044 = vst.msk [vmem:[#allocation2 + $0x60] sm:$0xff] %vm75, %v1028
    %1045 = vst.msk [vmem:[#allocation2 + $0x70] sm:$0xff] %vm75, %v1029
    %1046 = vst.msk [vmem:[#allocation2 + $0x80] sm:$0xff] %vm75, %v1030
    %1047 = vst.msk [vmem:[#allocation2 + $0x90] sm:$0xff] %vm75, %v1031
    %1048 = vst.msk [vmem:[#allocation2 + $0xa0] sm:$0xff] %vm75, %v1032
    %1049 = vst.msk [vmem:[#allocation2 + $0xb0] sm:$0xff] %vm75, %v1033
    %1050 = vst.msk [vmem:[#allocation2 + $0xc0] sm:$0xff] %vm75, %v1034
    %1051 = vst.msk [vmem:[#allocation2 + $0xd0] sm:$0xff] %vm75, %v1035
    %1052 = vst.msk [vmem:[#allocation2 + $0xe0] sm:$0xff] %vm75, %v1036
    %1053 = vst.msk [vmem:[#allocation2 + $0xf0] sm:$0xff] %vm75, %v1037
    %1054 = vrot.lane.b32.xlu0 %v110, 64
    %v1055 = vpop.permute.xlu0 %1054
    %1056 = vrot.lane.b32.xlu0 %v112, 64
    %v1057 = vpop.permute.xlu0 %1056
    %1058 = vrot.lane.b32.xlu0 %v115, 64
    %v1059 = vpop.permute.xlu0 %1058
    %1060 = vrot.lane.b32.xlu0 %v117, 64
    %v1061 = vpop.permute.xlu0 %1060
    %1062 = vrot.lane.b32.xlu0 %v120, 64
    %v1063 = vpop.permute.xlu0 %1062
    %1064 = vrot.lane.b32.xlu0 %v122, 64
    %v1065 = vpop.permute.xlu0 %1064
    %1066 = vrot.lane.b32.xlu0 %v125, 64
    %v1067 = vpop.permute.xlu0 %1066
    %1068 = vrot.lane.b32.xlu0 %v127, 64
    %v1069 = vpop.permute.xlu0 %1068
    %1070 = vrot.lane.b32.xlu0 %v130, 64
    %v1071 = vpop.permute.xlu0 %1070
    %1072 = vrot.lane.b32.xlu0 %v132, 64
    %v1073 = vpop.permute.xlu0 %1072
    %1074 = vrot.lane.b32.xlu0 %v135, 64
    %v1075 = vpop.permute.xlu0 %1074
    %1076 = vrot.lane.b32.xlu0 %v137, 64
    %v1077 = vpop.permute.xlu0 %1076
    %1078 = vrot.lane.b32.xlu0 %v140, 64
    %v1079 = vpop.permute.xlu0 %1078
    %1080 = vrot.lane.b32.xlu0 %v142, 64
    %v1081 = vpop.permute.xlu0 %1080
    %1082 = vrot.lane.b32.xlu0 %v145, 64
    %v1083 = vpop.permute.xlu0 %1082
    %1084 = vrot.lane.b32.xlu0 %v147, 64
    %v1085 = vpop.permute.xlu0 %1084
    %v1102 = vsel %vm151, %v1055, 0.0
    %1103 = vadd.xlane.f32.xlu0 %v1102
    %v1104 = vpop.xlane.xlu0 %1103
    %v1105 = vsel %vm151, %v1057, 0.0
    %1106 = vadd.xlane.f32.xlu0 %v1105
    %v1107 = vpop.xlane.xlu0 %1106
    %v1108 = vsel %vm151, %v1059, 0.0
    %1109 = vadd.xlane.f32.xlu0 %v1108
    %v1110 = vpop.xlane.xlu0 %1109
    %v1111 = vsel %vm151, %v1061, 0.0
    %1112 = vadd.xlane.f32.xlu0 %v1111
    %v1113 = vpop.xlane.xlu0 %1112
    %v1114 = vsel %vm151, %v1063, 0.0
    %1115 = vadd.xlane.f32.xlu0 %v1114
    %v1116 = vpop.xlane.xlu0 %1115
    %v1117 = vsel %vm151, %v1065, 0.0
    %1118 = vadd.xlane.f32.xlu0 %v1117
    %v1119 = vpop.xlane.xlu0 %1118
    %v1120 = vsel %vm151, %v1067, 0.0
    %1121 = vadd.xlane.f32.xlu0 %v1120
    %v1122 = vpop.xlane.xlu0 %1121
    %v1123 = vsel %vm151, %v1069, 0.0
    %1124 = vadd.xlane.f32.xlu0 %v1123
    %v1125 = vpop.xlane.xlu0 %1124
    %v1126 = vsel %vm151, %v1071, 0.0
    %1127 = vadd.xlane.f32.xlu0 %v1126
    %v1128 = vpop.xlane.xlu0 %1127
    %v1129 = vsel %vm151, %v1073, 0.0
    %1130 = vadd.xlane.f32.xlu0 %v1129
    %v1131 = vpop.xlane.xlu0 %1130
    %v1132 = vsel %vm151, %v1075, 0.0
    %1133 = vadd.xlane.f32.xlu0 %v1132
    %v1134 = vpop.xlane.xlu0 %1133
    %v1135 = vsel %vm151, %v1077, 0.0
    %1136 = vadd.xlane.f32.xlu0 %v1135
    %v1137 = vpop.xlane.xlu0 %1136
    %v1138 = vsel %vm151, %v1079, 0.0
    %1139 = vadd.xlane.f32.xlu0 %v1138
    %v1140 = vpop.xlane.xlu0 %1139
    %v1141 = vsel %vm151, %v1081, 0.0
    %1142 = vadd.xlane.f32.xlu0 %v1141
    %v1143 = vpop.xlane.xlu0 %1142
    %v1144 = vsel %vm151, %v1083, 0.0
    %1145 = vadd.xlane.f32.xlu0 %v1144
    %v1146 = vpop.xlane.xlu0 %1145
    %v1147 = vsel %vm151, %v1085, 0.0
    %1148 = vadd.xlane.f32.xlu0 %v1147
    %v1149 = vpop.xlane.xlu0 %1148
    %v1150 = vmul.f32 %v1104, 0.03125
    %v1151 = vmul.f32 %v1107, 0.03125
    %v1152 = vmul.f32 %v1110, 0.03125
    %v1153 = vmul.f32 %v1113, 0.03125
    %v1154 = vmul.f32 %v1116, 0.03125
    %v1155 = vmul.f32 %v1119, 0.03125
    %v1156 = vmul.f32 %v1122, 0.03125
    %v1157 = vmul.f32 %v1125, 0.03125
    %v1158 = vmul.f32 %v1128, 0.03125
    %v1159 = vmul.f32 %v1131, 0.03125
    %v1160 = vmul.f32 %v1134, 0.03125
    %v1161 = vmul.f32 %v1137, 0.03125
    %v1162 = vmul.f32 %v1140, 0.03125
    %v1163 = vmul.f32 %v1143, 0.03125
    %v1164 = vmul.f32 %v1146, 0.03125
    %v1165 = vmul.f32 %v1149, 0.03125
    %v1166 = vsub.f32 %v110, %v1150
    %v1167 = vsub.f32 %v112, %v1151
    %v1168 = vsub.f32 %v115, %v1152
    %v1169 = vsub.f32 %v117, %v1153
    %v1170 = vsub.f32 %v120, %v1154
    %v1171 = vsub.f32 %v122, %v1155
    %v1172 = vsub.f32 %v125, %v1156
    %v1173 = vsub.f32 %v127, %v1157
    %v1174 = vsub.f32 %v130, %v1158
    %v1175 = vsub.f32 %v132, %v1159
    %v1176 = vsub.f32 %v135, %v1160
    %v1177 = vsub.f32 %v137, %v1161
    %v1178 = vsub.f32 %v140, %v1162
    %v1179 = vsub.f32 %v142, %v1163
    %v1180 = vsub.f32 %v145, %v1164
    %v1181 = vsub.f32 %v147, %v1165
    %v1182 = vmul.f32 %v1166, %v1166
    %v1183 = vmul.f32 %v1167, %v1167
    %v1184 = vmul.f32 %v1168, %v1168
    %v1185 = vmul.f32 %v1169, %v1169
    %v1186 = vmul.f32 %v1170, %v1170
    %v1187 = vmul.f32 %v1171, %v1171
    %v1188 = vmul.f32 %v1172, %v1172
    %v1189 = vmul.f32 %v1173, %v1173
    %v1190 = vmul.f32 %v1174, %v1174
    %v1191 = vmul.f32 %v1175, %v1175
    %v1192 = vmul.f32 %v1176, %v1176
    %v1193 = vmul.f32 %v1177, %v1177
    %v1194 = vmul.f32 %v1178, %v1178
    %v1195 = vmul.f32 %v1179, %v1179
    %v1196 = vmul.f32 %v1180, %v1180
    %v1197 = vmul.f32 %v1181, %v1181
    %1214 = vrot.lane.b32.xlu0 %v1182, 64
    %v1215 = vpop.permute.xlu0 %1214
    %1216 = vrot.lane.b32.xlu0 %v1183, 64
    %v1217 = vpop.permute.xlu0 %1216
    %1218 = vrot.lane.b32.xlu0 %v1184, 64
    %v1219 = vpop.permute.xlu0 %1218
    %1220 = vrot.lane.b32.xlu0 %v1185, 64
    %v1221 = vpop.permute.xlu0 %1220
    %1222 = vrot.lane.b32.xlu0 %v1186, 64
    %v1223 = vpop.permute.xlu0 %1222
    %1224 = vrot.lane.b32.xlu0 %v1187, 64
    %v1225 = vpop.permute.xlu0 %1224
    %1226 = vrot.lane.b32.xlu0 %v1188, 64
    %v1227 = vpop.permute.xlu0 %1226
    %1228 = vrot.lane.b32.xlu0 %v1189, 64
    %v1229 = vpop.permute.xlu0 %1228
    %1230 = vrot.lane.b32.xlu0 %v1190, 64
    %v1231 = vpop.permute.xlu0 %1230
    %1232 = vrot.lane.b32.xlu0 %v1191, 64
    %v1233 = vpop.permute.xlu0 %1232
    %1234 = vrot.lane.b32.xlu0 %v1192, 64
    %v1235 = vpop.permute.xlu0 %1234
    %1236 = vrot.lane.b32.xlu0 %v1193, 64
    %v1237 = vpop.permute.xlu0 %1236
    %1238 = vrot.lane.b32.xlu0 %v1194, 64
    %v1239 = vpop.permute.xlu0 %1238
    %1240 = vrot.lane.b32.xlu0 %v1195, 64
    %v1241 = vpop.permute.xlu0 %1240
    %1242 = vrot.lane.b32.xlu0 %v1196, 64
    %v1243 = vpop.permute.xlu0 %1242
    %1244 = vrot.lane.b32.xlu0 %v1197, 64
    %v1245 = vpop.permute.xlu0 %1244
    %v1262 = vsel %vm151, %v1215, 0.0
    %1263 = vadd.xlane.f32.xlu0 %v1262
    %v1264 = vpop.xlane.xlu0 %1263
    %v1265 = vsel %vm151, %v1217, 0.0
    %1266 = vadd.xlane.f32.xlu0 %v1265
    %v1267 = vpop.xlane.xlu0 %1266
    %v1268 = vsel %vm151, %v1219, 0.0
    %1269 = vadd.xlane.f32.xlu0 %v1268
    %v1270 = vpop.xlane.xlu0 %1269
    %v1271 = vsel %vm151, %v1221, 0.0
    %1272 = vadd.xlane.f32.xlu0 %v1271
    %v1273 = vpop.xlane.xlu0 %1272
    %v1274 = vsel %vm151, %v1223, 0.0
    %1275 = vadd.xlane.f32.xlu0 %v1274
    %v1276 = vpop.xlane.xlu0 %1275
    %v1277 = vsel %vm151, %v1225, 0.0
    %1278 = vadd.xlane.f32.xlu0 %v1277
    %v1279 = vpop.xlane.xlu0 %1278
    %v1280 = vsel %vm151, %v1227, 0.0
    %1281 = vadd.xlane.f32.xlu0 %v1280
    %v1282 = vpop.xlane.xlu0 %1281
    %v1283 = vsel %vm151, %v1229, 0.0
    %1284 = vadd.xlane.f32.xlu0 %v1283
    %v1285 = vpop.xlane.xlu0 %1284
    %v1286 = vsel %vm151, %v1231, 0.0
    %1287 = vadd.xlane.f32.xlu0 %v1286
    %v1288 = vpop.xlane.xlu0 %1287
    %v1289 = vsel %vm151, %v1233, 0.0
    %1290 = vadd.xlane.f32.xlu0 %v1289
    %v1291 = vpop.xlane.xlu0 %1290
    %v1292 = vsel %vm151, %v1235, 0.0
    %1293 = vadd.xlane.f32.xlu0 %v1292
    %v1294 = vpop.xlane.xlu0 %1293
    %v1295 = vsel %vm151, %v1237, 0.0
    %1296 = vadd.xlane.f32.xlu0 %v1295
    %v1297 = vpop.xlane.xlu0 %1296
    %v1298 = vsel %vm151, %v1239, 0.0
    %1299 = vadd.xlane.f32.xlu0 %v1298
    %v1300 = vpop.xlane.xlu0 %1299
    %v1301 = vsel %vm151, %v1241, 0.0
    %1302 = vadd.xlane.f32.xlu0 %v1301
    %v1303 = vpop.xlane.xlu0 %1302
    %v1304 = vsel %vm151, %v1243, 0.0
    %1305 = vadd.xlane.f32.xlu0 %v1304
    %v1306 = vpop.xlane.xlu0 %1305
    %v1307 = vsel %vm151, %v1245, 0.0
    %1308 = vadd.xlane.f32.xlu0 %v1307
    %v1309 = vpop.xlane.xlu0 %1308
    %v1310 = vmul.f32 %v1264, 0.03125
    %v1311 = vmul.f32 %v1267, 0.03125
    %v1312 = vmul.f32 %v1270, 0.03125
    %v1313 = vmul.f32 %v1273, 0.03125
    %v1314 = vmul.f32 %v1276, 0.03125
    %v1315 = vmul.f32 %v1279, 0.03125
    %v1316 = vmul.f32 %v1282, 0.03125
    %v1317 = vmul.f32 %v1285, 0.03125
    %v1318 = vmul.f32 %v1288, 0.03125
    %v1319 = vmul.f32 %v1291, 0.03125
    %v1320 = vmul.f32 %v1294, 0.03125
    %v1321 = vmul.f32 %v1297, 0.03125
    %v1322 = vmul.f32 %v1300, 0.03125
    %v1323 = vmul.f32 %v1303, 0.03125
    %v1324 = vmul.f32 %v1306, 0.03125
    %v1325 = vmul.f32 %v1309, 0.03125
    %v1326 = vadd.f32 %v1310, 1e-05
    %v1327 = vadd.f32 %v1311, 1e-05
    %v1328 = vadd.f32 %v1312, 1e-05
    %v1329 = vadd.f32 %v1313, 1e-05
    %v1330 = vadd.f32 %v1314, 1e-05
    %v1331 = vadd.f32 %v1315, 1e-05
    %v1332 = vadd.f32 %v1316, 1e-05
    %v1333 = vadd.f32 %v1317, 1e-05
    %v1334 = vadd.f32 %v1318, 1e-05
    %v1335 = vadd.f32 %v1319, 1e-05
    %v1336 = vadd.f32 %v1320, 1e-05
    %v1337 = vadd.f32 %v1321, 1e-05
    %v1338 = vadd.f32 %v1322, 1e-05
    %v1339 = vadd.f32 %v1323, 1e-05
    %v1340 = vadd.f32 %v1324, 1e-05
    %v1341 = vadd.f32 %v1325, 1e-05
    %v1342 = vrsqrt.pop %v1326
    %v1343 = vmul.f32 %v1342, %v1326
    %v1344 = vmul.f32 %v1343, %v1342
    %v1345 = vmul.f32 0.5, %v1344
    %v1346 = vsub.f32 1.5, %v1345
    %v1347 = vmul.f32 %v1342, %v1346
    %vm1348 = vweird.f32 %v1326
    %vm1349 = vweird.f32 %v1342
    %vm1350 = vmor %vm1348, %vm1349
    %v1351 = vsel %vm1350, %v1342, %v1347
    %v1352 = vrsqrt.pop %v1327
    %v1353 = vmul.f32 %v1352, %v1327
    %v1354 = vmul.f32 %v1353, %v1352
    %v1355 = vmul.f32 0.5, %v1354
    %v1356 = vsub.f32 1.5, %v1355
    %v1357 = vmul.f32 %v1352, %v1356
    %vm1358 = vweird.f32 %v1327
    %vm1359 = vweird.f32 %v1352
    %vm1360 = vmor %vm1358, %vm1359
    %v1361 = vsel %vm1360, %v1352, %v1357
    %v1362 = vrsqrt.pop %v1328
    %v1363 = vmul.f32 %v1362, %v1328
    %v1364 = vmul.f32 %v1363, %v1362
    %v1365 = vmul.f32 0.5, %v1364
    %v1366 = vsub.f32 1.5, %v1365
    %v1367 = vmul.f32 %v1362, %v1366
    %vm1368 = vweird.f32 %v1328
    %vm1369 = vweird.f32 %v1362
    %vm1370 = vmor %vm1368, %vm1369
    %v1371 = vsel %vm1370, %v1362, %v1367
    %v1372 = vrsqrt.pop %v1329
    %v1373 = vmul.f32 %v1372, %v1329
    %v1374 = vmul.f32 %v1373, %v1372
    %v1375 = vmul.f32 0.5, %v1374
    %v1376 = vsub.f32 1.5, %v1375
    %v1377 = vmul.f32 %v1372, %v1376
    %vm1378 = vweird.f32 %v1329
    %vm1379 = vweird.f32 %v1372
    %vm1380 = vmor %vm1378, %vm1379
    %v1381 = vsel %vm1380, %v1372, %v1377
    %v1382 = vrsqrt.pop %v1330
    %v1383 = vmul.f32 %v1382, %v1330
    %v1384 = vmul.f32 %v1383, %v1382
    %v1385 = vmul.f32 0.5, %v1384
    %v1386 = vsub.f32 1.5, %v1385
    %v1387 = vmul.f32 %v1382, %v1386
    %vm1388 = vweird.f32 %v1330
    %vm1389 = vweird.f32 %v1382
    %vm1390 = vmor %vm1388, %vm1389
    %v1391 = vsel %vm1390, %v1382, %v1387
    %v1392 = vrsqrt.pop %v1331
    %v1393 = vmul.f32 %v1392, %v1331
    %v1394 = vmul.f32 %v1393, %v1392
    %v1395 = vmul.f32 0.5, %v1394
    %v1396 = vsub.f32 1.5, %v1395
    %v1397 = vmul.f32 %v1392, %v1396
    %vm1398 = vweird.f32 %v1331
    %vm1399 = vweird.f32 %v1392
    %vm1400 = vmor %vm1398, %vm1399
    %v1401 = vsel %vm1400, %v1392, %v1397
    %v1402 = vrsqrt.pop %v1332
    %v1403 = vmul.f32 %v1402, %v1332
    %v1404 = vmul.f32 %v1403, %v1402
    %v1405 = vmul.f32 0.5, %v1404
    %v1406 = vsub.f32 1.5, %v1405
    %v1407 = vmul.f32 %v1402, %v1406
    %vm1408 = vweird.f32 %v1332
    %vm1409 = vweird.f32 %v1402
    %vm1410 = vmor %vm1408, %vm1409
    %v1411 = vsel %vm1410, %v1402, %v1407
    %v1412 = vrsqrt.pop %v1333
    %v1413 = vmul.f32 %v1412, %v1333
    %v1414 = vmul.f32 %v1413, %v1412
    %v1415 = vmul.f32 0.5, %v1414
    %v1416 = vsub.f32 1.5, %v1415
    %v1417 = vmul.f32 %v1412, %v1416
    %vm1418 = vweird.f32 %v1333
    %vm1419 = vweird.f32 %v1412
    %vm1420 = vmor %vm1418, %vm1419
    %v1421 = vsel %vm1420, %v1412, %v1417
    %v1422 = vrsqrt.pop %v1334
    %v1423 = vmul.f32 %v1422, %v1334
    %v1424 = vmul.f32 %v1423, %v1422
    %v1425 = vmul.f32 0.5, %v1424
    %v1426 = vsub.f32 1.5, %v1425
    %v1427 = vmul.f32 %v1422, %v1426
    %vm1428 = vweird.f32 %v1334
    %vm1429 = vweird.f32 %v1422
    %vm1430 = vmor %vm1428, %vm1429
    %v1431 = vsel %vm1430, %v1422, %v1427
    %v1432 = vrsqrt.pop %v1335
    %v1433 = vmul.f32 %v1432, %v1335
    %v1434 = vmul.f32 %v1433, %v1432
    %v1435 = vmul.f32 0.5, %v1434
    %v1436 = vsub.f32 1.5, %v1435
    %v1437 = vmul.f32 %v1432, %v1436
    %vm1438 = vweird.f32 %v1335
    %vm1439 = vweird.f32 %v1432
    %vm1440 = vmor %vm1438, %vm1439
    %v1441 = vsel %vm1440, %v1432, %v1437
    %v1442 = vrsqrt.pop %v1336
    %v1443 = vmul.f32 %v1442, %v1336
    %v1444 = vmul.f32 %v1443, %v1442
    %v1445 = vmul.f32 0.5, %v1444
    %v1446 = vsub.f32 1.5, %v1445
    %v1447 = vmul.f32 %v1442, %v1446
    %vm1448 = vweird.f32 %v1336
    %vm1449 = vweird.f32 %v1442
    %vm1450 = vmor %vm1448, %vm1449
    %v1451 = vsel %vm1450, %v1442, %v1447
    %v1452 = vrsqrt.pop %v1337
    %v1453 = vmul.f32 %v1452, %v1337
    %v1454 = vmul.f32 %v1453, %v1452
    %v1455 = vmul.f32 0.5, %v1454
    %v1456 = vsub.f32 1.5, %v1455
    %v1457 = vmul.f32 %v1452, %v1456
    %vm1458 = vweird.f32 %v1337
    %vm1459 = vweird.f32 %v1452
    %vm1460 = vmor %vm1458, %vm1459
    %v1461 = vsel %vm1460, %v1452, %v1457
    %v1462 = vrsqrt.pop %v1338
    %v1463 = vmul.f32 %v1462, %v1338
    %v1464 = vmul.f32 %v1463, %v1462
    %v1465 = vmul.f32 0.5, %v1464
    %v1466 = vsub.f32 1.5, %v1465
    %v1467 = vmul.f32 %v1462, %v1466
    %vm1468 = vweird.f32 %v1338
    %vm1469 = vweird.f32 %v1462
    %vm1470 = vmor %vm1468, %vm1469
    %v1471 = vsel %vm1470, %v1462, %v1467
    %v1472 = vrsqrt.pop %v1339
    %v1473 = vmul.f32 %v1472, %v1339
    %v1474 = vmul.f32 %v1473, %v1472
    %v1475 = vmul.f32 0.5, %v1474
    %v1476 = vsub.f32 1.5, %v1475
    %v1477 = vmul.f32 %v1472, %v1476
    %vm1478 = vweird.f32 %v1339
    %vm1479 = vweird.f32 %v1472
    %vm1480 = vmor %vm1478, %vm1479
    %v1481 = vsel %vm1480, %v1472, %v1477
    %v1482 = vrsqrt.pop %v1340
    %v1483 = vmul.f32 %v1482, %v1340
    %v1484 = vmul.f32 %v1483, %v1482
    %v1485 = vmul.f32 0.5, %v1484
    %v1486 = vsub.f32 1.5, %v1485
    %v1487 = vmul.f32 %v1482, %v1486
    %vm1488 = vweird.f32 %v1340
    %vm1489 = vweird.f32 %v1482
    %vm1490 = vmor %vm1488, %vm1489
    %v1491 = vsel %vm1490, %v1482, %v1487
    %v1492 = vrsqrt.pop %v1341
    %v1493 = vmul.f32 %v1492, %v1341
    %v1494 = vmul.f32 %v1493, %v1492
    %v1495 = vmul.f32 0.5, %v1494
    %v1496 = vsub.f32 1.5, %v1495
    %v1497 = vmul.f32 %v1492, %v1496
    %vm1498 = vweird.f32 %v1341
    %vm1499 = vweird.f32 %v1492
    %vm1500 = vmor %vm1498, %vm1499
    %v1501 = vsel %vm1500, %v1492, %v1497
    %v1502 = vmul.f32 %v1166, %v1351
    %v1503 = vmul.f32 %v1167, %v1361
    %v1504 = vmul.f32 %v1168, %v1371
    %v1505 = vmul.f32 %v1169, %v1381
    %v1506 = vmul.f32 %v1170, %v1391
    %v1507 = vmul.f32 %v1171, %v1401
    %v1508 = vmul.f32 %v1172, %v1411
    %v1509 = vmul.f32 %v1173, %v1421
    %v1510 = vmul.f32 %v1174, %v1431
    %v1511 = vmul.f32 %v1175, %v1441
    %v1512 = vmul.f32 %v1176, %v1451
    %v1513 = vmul.f32 %v1177, %v1461
    %v1514 = vmul.f32 %v1178, %v1471
    %v1515 = vmul.f32 %v1179, %v1481
    %v1516 = vmul.f32 %v1180, %v1491
    %v1517 = vmul.f32 %v1181, %v1501
    %1518 = vrot.lane.b32.xlu0 %v110, 32
    %v1519 = vpop.permute.xlu0 %1518
    %1520 = vrot.lane.b32.xlu0 %v112, 32
    %v1521 = vpop.permute.xlu0 %1520
    %1522 = vrot.lane.b32.xlu0 %v115, 32
    %v1523 = vpop.permute.xlu0 %1522
    %1524 = vrot.lane.b32.xlu0 %v117, 32
    %v1525 = vpop.permute.xlu0 %1524
    %1526 = vrot.lane.b32.xlu0 %v120, 32
    %v1527 = vpop.permute.xlu0 %1526
    %1528 = vrot.lane.b32.xlu0 %v122, 32
    %v1529 = vpop.permute.xlu0 %1528
    %1530 = vrot.lane.b32.xlu0 %v125, 32
    %v1531 = vpop.permute.xlu0 %1530
    %1532 = vrot.lane.b32.xlu0 %v127, 32
    %v1533 = vpop.permute.xlu0 %1532
    %1534 = vrot.lane.b32.xlu0 %v130, 32
    %v1535 = vpop.permute.xlu0 %1534
    %1536 = vrot.lane.b32.xlu0 %v132, 32
    %v1537 = vpop.permute.xlu0 %1536
    %1538 = vrot.lane.b32.xlu0 %v135, 32
    %v1539 = vpop.permute.xlu0 %1538
    %1540 = vrot.lane.b32.xlu0 %v137, 32
    %v1541 = vpop.permute.xlu0 %1540
    %1542 = vrot.lane.b32.xlu0 %v140, 32
    %v1543 = vpop.permute.xlu0 %1542
    %1544 = vrot.lane.b32.xlu0 %v142, 32
    %v1545 = vpop.permute.xlu0 %1544
    %1546 = vrot.lane.b32.xlu0 %v145, 32
    %v1547 = vpop.permute.xlu0 %1546
    %1548 = vrot.lane.b32.xlu0 %v147, 32
    %v1549 = vpop.permute.xlu0 %1548
    %v1566 = vsel %vm151, %v1519, 0.0
    %1567 = vadd.xlane.f32.xlu0 %v1566
    %v1568 = vpop.xlane.xlu0 %1567
    %v1569 = vsel %vm151, %v1521, 0.0
    %1570 = vadd.xlane.f32.xlu0 %v1569
    %v1571 = vpop.xlane.xlu0 %1570
    %v1572 = vsel %vm151, %v1523, 0.0
    %1573 = vadd.xlane.f32.xlu0 %v1572
    %v1574 = vpop.xlane.xlu0 %1573
    %v1575 = vsel %vm151, %v1525, 0.0
    %1576 = vadd.xlane.f32.xlu0 %v1575
    %v1577 = vpop.xlane.xlu0 %1576
    %v1578 = vsel %vm151, %v1527, 0.0
    %1579 = vadd.xlane.f32.xlu0 %v1578
    %v1580 = vpop.xlane.xlu0 %1579
    %v1581 = vsel %vm151, %v1529, 0.0
    %1582 = vadd.xlane.f32.xlu0 %v1581
    %v1583 = vpop.xlane.xlu0 %1582
    %v1584 = vsel %vm151, %v1531, 0.0
    %1585 = vadd.xlane.f32.xlu0 %v1584
    %v1586 = vpop.xlane.xlu0 %1585
    %v1587 = vsel %vm151, %v1533, 0.0
    %1588 = vadd.xlane.f32.xlu0 %v1587
    %v1589 = vpop.xlane.xlu0 %1588
    %v1590 = vsel %vm151, %v1535, 0.0
    %1591 = vadd.xlane.f32.xlu0 %v1590
    %v1592 = vpop.xlane.xlu0 %1591
    %v1593 = vsel %vm151, %v1537, 0.0
    %1594 = vadd.xlane.f32.xlu0 %v1593
    %v1595 = vpop.xlane.xlu0 %1594
    %v1596 = vsel %vm151, %v1539, 0.0
    %1597 = vadd.xlane.f32.xlu0 %v1596
    %v1598 = vpop.xlane.xlu0 %1597
    %v1599 = vsel %vm151, %v1541, 0.0
    %1600 = vadd.xlane.f32.xlu0 %v1599
    %v1601 = vpop.xlane.xlu0 %1600
    %v1602 = vsel %vm151, %v1543, 0.0
    %1603 = vadd.xlane.f32.xlu0 %v1602
    %v1604 = vpop.xlane.xlu0 %1603
    %v1605 = vsel %vm151, %v1545, 0.0
    %1606 = vadd.xlane.f32.xlu0 %v1605
    %v1607 = vpop.xlane.xlu0 %1606
    %v1608 = vsel %vm151, %v1547, 0.0
    %1609 = vadd.xlane.f32.xlu0 %v1608
    %v1610 = vpop.xlane.xlu0 %1609
    %v1611 = vsel %vm151, %v1549, 0.0
    %1612 = vadd.xlane.f32.xlu0 %v1611
    %v1613 = vpop.xlane.xlu0 %1612
    %v1614 = vmul.f32 %v1568, 0.03125
    %v1615 = vmul.f32 %v1571, 0.03125
    %v1616 = vmul.f32 %v1574, 0.03125
    %v1617 = vmul.f32 %v1577, 0.03125
    %v1618 = vmul.f32 %v1580, 0.03125
    %v1619 = vmul.f32 %v1583, 0.03125
    %v1620 = vmul.f32 %v1586, 0.03125
    %v1621 = vmul.f32 %v1589, 0.03125
    %v1622 = vmul.f32 %v1592, 0.03125
    %v1623 = vmul.f32 %v1595, 0.03125
    %v1624 = vmul.f32 %v1598, 0.03125
    %v1625 = vmul.f32 %v1601, 0.03125
    %v1626 = vmul.f32 %v1604, 0.03125
    %v1627 = vmul.f32 %v1607, 0.03125
    %v1628 = vmul.f32 %v1610, 0.03125
    %v1629 = vmul.f32 %v1613, 0.03125
    %v1630 = vsub.f32 %v110, %v1614
    %v1631 = vsub.f32 %v112, %v1615
    %v1632 = vsub.f32 %v115, %v1616
    %v1633 = vsub.f32 %v117, %v1617
    %v1634 = vsub.f32 %v120, %v1618
    %v1635 = vsub.f32 %v122, %v1619
    %v1636 = vsub.f32 %v125, %v1620
    %v1637 = vsub.f32 %v127, %v1621
    %v1638 = vsub.f32 %v130, %v1622
    %v1639 = vsub.f32 %v132, %v1623
    %v1640 = vsub.f32 %v135, %v1624
    %v1641 = vsub.f32 %v137, %v1625
    %v1642 = vsub.f32 %v140, %v1626
    %v1643 = vsub.f32 %v142, %v1627
    %v1644 = vsub.f32 %v145, %v1628
    %v1645 = vsub.f32 %v147, %v1629
    %v1646 = vmul.f32 %v1630, %v1630
    %v1647 = vmul.f32 %v1631, %v1631
    %v1648 = vmul.f32 %v1632, %v1632
    %v1649 = vmul.f32 %v1633, %v1633
    %v1650 = vmul.f32 %v1634, %v1634
    %v1651 = vmul.f32 %v1635, %v1635
    %v1652 = vmul.f32 %v1636, %v1636
    %v1653 = vmul.f32 %v1637, %v1637
    %v1654 = vmul.f32 %v1638, %v1638
    %v1655 = vmul.f32 %v1639, %v1639
    %v1656 = vmul.f32 %v1640, %v1640
    %v1657 = vmul.f32 %v1641, %v1641
    %v1658 = vmul.f32 %v1642, %v1642
    %v1659 = vmul.f32 %v1643, %v1643
    %v1660 = vmul.f32 %v1644, %v1644
    %v1661 = vmul.f32 %v1645, %v1645
    %1678 = vrot.lane.b32.xlu0 %v1646, 32
    %v1679 = vpop.permute.xlu0 %1678
    %1680 = vrot.lane.b32.xlu0 %v1647, 32
    %v1681 = vpop.permute.xlu0 %1680
    %1682 = vrot.lane.b32.xlu0 %v1648, 32
    %v1683 = vpop.permute.xlu0 %1682
    %1684 = vrot.lane.b32.xlu0 %v1649, 32
    %v1685 = vpop.permute.xlu0 %1684
    %1686 = vrot.lane.b32.xlu0 %v1650, 32
    %v1687 = vpop.permute.xlu0 %1686
    %1688 = vrot.lane.b32.xlu0 %v1651, 32
    %v1689 = vpop.permute.xlu0 %1688
    %1690 = vrot.lane.b32.xlu0 %v1652, 32
    %v1691 = vpop.permute.xlu0 %1690
    %1692 = vrot.lane.b32.xlu0 %v1653, 32
    %v1693 = vpop.permute.xlu0 %1692
    %1694 = vrot.lane.b32.xlu0 %v1654, 32
    %v1695 = vpop.permute.xlu0 %1694
    %1696 = vrot.lane.b32.xlu0 %v1655, 32
    %v1697 = vpop.permute.xlu0 %1696
    %1698 = vrot.lane.b32.xlu0 %v1656, 32
    %v1699 = vpop.permute.xlu0 %1698
    %1700 = vrot.lane.b32.xlu0 %v1657, 32
    %v1701 = vpop.permute.xlu0 %1700
    %1702 = vrot.lane.b32.xlu0 %v1658, 32
    %v1703 = vpop.permute.xlu0 %1702
    %1704 = vrot.lane.b32.xlu0 %v1659, 32
    %v1705 = vpop.permute.xlu0 %1704
    %1706 = vrot.lane.b32.xlu0 %v1660, 32
    %v1707 = vpop.permute.xlu0 %1706
    %1708 = vrot.lane.b32.xlu0 %v1661, 32
    %v1709 = vpop.permute.xlu0 %1708
    %v1726 = vsel %vm151, %v1679, 0.0
    %1727 = vadd.xlane.f32.xlu0 %v1726
    %v1728 = vpop.xlane.xlu0 %1727
    %v1729 = vsel %vm151, %v1681, 0.0
    %1730 = vadd.xlane.f32.xlu0 %v1729
    %v1731 = vpop.xlane.xlu0 %1730
    %v1732 = vsel %vm151, %v1683, 0.0
    %1733 = vadd.xlane.f32.xlu0 %v1732
    %v1734 = vpop.xlane.xlu0 %1733
    %v1735 = vsel %vm151, %v1685, 0.0
    %1736 = vadd.xlane.f32.xlu0 %v1735
    %v1737 = vpop.xlane.xlu0 %1736
    %v1738 = vsel %vm151, %v1687, 0.0
    %1739 = vadd.xlane.f32.xlu0 %v1738
    %v1740 = vpop.xlane.xlu0 %1739
    %v1741 = vsel %vm151, %v1689, 0.0
    %1742 = vadd.xlane.f32.xlu0 %v1741
    %v1743 = vpop.xlane.xlu0 %1742
    %v1744 = vsel %vm151, %v1691, 0.0
    %1745 = vadd.xlane.f32.xlu0 %v1744
    %v1746 = vpop.xlane.xlu0 %1745
    %v1747 = vsel %vm151, %v1693, 0.0
    %1748 = vadd.xlane.f32.xlu0 %v1747
    %v1749 = vpop.xlane.xlu0 %1748
    %v1750 = vsel %vm151, %v1695, 0.0
    %1751 = vadd.xlane.f32.xlu0 %v1750
    %v1752 = vpop.xlane.xlu0 %1751
    %v1753 = vsel %vm151, %v1697, 0.0
    %1754 = vadd.xlane.f32.xlu0 %v1753
    %v1755 = vpop.xlane.xlu0 %1754
    %v1756 = vsel %vm151, %v1699, 0.0
    %1757 = vadd.xlane.f32.xlu0 %v1756
    %v1758 = vpop.xlane.xlu0 %1757
    %v1759 = vsel %vm151, %v1701, 0.0
    %1760 = vadd.xlane.f32.xlu0 %v1759
    %v1761 = vpop.xlane.xlu0 %1760
    %v1762 = vsel %vm151, %v1703, 0.0
    %1763 = vadd.xlane.f32.xlu0 %v1762
    %v1764 = vpop.xlane.xlu0 %1763
    %v1765 = vsel %vm151, %v1705, 0.0
    %1766 = vadd.xlane.f32.xlu0 %v1765
    %v1767 = vpop.xlane.xlu0 %1766
    %v1768 = vsel %vm151, %v1707, 0.0
    %1769 = vadd.xlane.f32.xlu0 %v1768
    %v1770 = vpop.xlane.xlu0 %1769
    %v1771 = vsel %vm151, %v1709, 0.0
    %1772 = vadd.xlane.f32.xlu0 %v1771
    %v1773 = vpop.xlane.xlu0 %1772
    %v1774 = vmul.f32 %v1728, 0.03125
    %v1775 = vmul.f32 %v1731, 0.03125
    %v1776 = vmul.f32 %v1734, 0.03125
    %v1777 = vmul.f32 %v1737, 0.03125
    %v1778 = vmul.f32 %v1740, 0.03125
    %v1779 = vmul.f32 %v1743, 0.03125
    %v1780 = vmul.f32 %v1746, 0.03125
    %v1781 = vmul.f32 %v1749, 0.03125
    %v1782 = vmul.f32 %v1752, 0.03125
    %v1783 = vmul.f32 %v1755, 0.03125
    %v1784 = vmul.f32 %v1758, 0.03125
    %v1785 = vmul.f32 %v1761, 0.03125
    %v1786 = vmul.f32 %v1764, 0.03125
    %v1787 = vmul.f32 %v1767, 0.03125
    %v1788 = vmul.f32 %v1770, 0.03125
    %v1789 = vmul.f32 %v1773, 0.03125
    %v1790 = vadd.f32 %v1774, 1e-05
    %v1791 = vadd.f32 %v1775, 1e-05
    %v1792 = vadd.f32 %v1776, 1e-05
    %v1793 = vadd.f32 %v1777, 1e-05
    %v1794 = vadd.f32 %v1778, 1e-05
    %v1795 = vadd.f32 %v1779, 1e-05
    %v1796 = vadd.f32 %v1780, 1e-05
    %v1797 = vadd.f32 %v1781, 1e-05
    %v1798 = vadd.f32 %v1782, 1e-05
    %v1799 = vadd.f32 %v1783, 1e-05
    %v1800 = vadd.f32 %v1784, 1e-05
    %v1801 = vadd.f32 %v1785, 1e-05
    %v1802 = vadd.f32 %v1786, 1e-05
    %v1803 = vadd.f32 %v1787, 1e-05
    %v1804 = vadd.f32 %v1788, 1e-05
    %v1805 = vadd.f32 %v1789, 1e-05
    %v1806 = vrsqrt.pop %v1790
    %v1807 = vmul.f32 %v1806, %v1790
    %v1808 = vmul.f32 %v1807, %v1806
    %v1809 = vmul.f32 0.5, %v1808
    %v1810 = vsub.f32 1.5, %v1809
    %v1811 = vmul.f32 %v1806, %v1810
    %vm1812 = vweird.f32 %v1790
    %vm1813 = vweird.f32 %v1806
    %vm1814 = vmor %vm1812, %vm1813
    %v1815 = vsel %vm1814, %v1806, %v1811
    %v1816 = vrsqrt.pop %v1791
    %v1817 = vmul.f32 %v1816, %v1791
    %v1818 = vmul.f32 %v1817, %v1816
    %v1819 = vmul.f32 0.5, %v1818
    %v1820 = vsub.f32 1.5, %v1819
    %v1821 = vmul.f32 %v1816, %v1820
    %vm1822 = vweird.f32 %v1791
    %vm1823 = vweird.f32 %v1816
    %vm1824 = vmor %vm1822, %vm1823
    %v1825 = vsel %vm1824, %v1816, %v1821
    %v1826 = vrsqrt.pop %v1792
    %v1827 = vmul.f32 %v1826, %v1792
    %v1828 = vmul.f32 %v1827, %v1826
    %v1829 = vmul.f32 0.5, %v1828
    %v1830 = vsub.f32 1.5, %v1829
    %v1831 = vmul.f32 %v1826, %v1830
    %vm1832 = vweird.f32 %v1792
    %vm1833 = vweird.f32 %v1826
    %vm1834 = vmor %vm1832, %vm1833
    %v1835 = vsel %vm1834, %v1826, %v1831
    %v1836 = vrsqrt.pop %v1793
    %v1837 = vmul.f32 %v1836, %v1793
    %v1838 = vmul.f32 %v1837, %v1836
    %v1839 = vmul.f32 0.5, %v1838
    %v1840 = vsub.f32 1.5, %v1839
    %v1841 = vmul.f32 %v1836, %v1840
    %vm1842 = vweird.f32 %v1793
    %vm1843 = vweird.f32 %v1836
    %vm1844 = vmor %vm1842, %vm1843
    %v1845 = vsel %vm1844, %v1836, %v1841
    %v1846 = vrsqrt.pop %v1794
    %v1847 = vmul.f32 %v1846, %v1794
    %v1848 = vmul.f32 %v1847, %v1846
    %v1849 = vmul.f32 0.5, %v1848
    %v1850 = vsub.f32 1.5, %v1849
    %v1851 = vmul.f32 %v1846, %v1850
    %vm1852 = vweird.f32 %v1794
    %vm1853 = vweird.f32 %v1846
    %vm1854 = vmor %vm1852, %vm1853
    %v1855 = vsel %vm1854, %v1846, %v1851
    %v1856 = vrsqrt.pop %v1795
    %v1857 = vmul.f32 %v1856, %v1795
    %v1858 = vmul.f32 %v1857, %v1856
    %v1859 = vmul.f32 0.5, %v1858
    %v1860 = vsub.f32 1.5, %v1859
    %v1861 = vmul.f32 %v1856, %v1860
    %vm1862 = vweird.f32 %v1795
    %vm1863 = vweird.f32 %v1856
    %vm1864 = vmor %vm1862, %vm1863
    %v1865 = vsel %vm1864, %v1856, %v1861
    %v1866 = vrsqrt.pop %v1796
    %v1867 = vmul.f32 %v1866, %v1796
    %v1868 = vmul.f32 %v1867, %v1866
    %v1869 = vmul.f32 0.5, %v1868
    %v1870 = vsub.f32 1.5, %v1869
    %v1871 = vmul.f32 %v1866, %v1870
    %vm1872 = vweird.f32 %v1796
    %vm1873 = vweird.f32 %v1866
    %vm1874 = vmor %vm1872, %vm1873
    %v1875 = vsel %vm1874, %v1866, %v1871
    %v1876 = vrsqrt.pop %v1797
    %v1877 = vmul.f32 %v1876, %v1797
    %v1878 = vmul.f32 %v1877, %v1876
    %v1879 = vmul.f32 0.5, %v1878
    %v1880 = vsub.f32 1.5, %v1879
    %v1881 = vmul.f32 %v1876, %v1880
    %vm1882 = vweird.f32 %v1797
    %vm1883 = vweird.f32 %v1876
    %vm1884 = vmor %vm1882, %vm1883
    %v1885 = vsel %vm1884, %v1876, %v1881
    %v1886 = vrsqrt.pop %v1798
    %v1887 = vmul.f32 %v1886, %v1798
    %v1888 = vmul.f32 %v1887, %v1886
    %v1889 = vmul.f32 0.5, %v1888
    %v1890 = vsub.f32 1.5, %v1889
    %v1891 = vmul.f32 %v1886, %v1890
    %vm1892 = vweird.f32 %v1798
    %vm1893 = vweird.f32 %v1886
    %vm1894 = vmor %vm1892, %vm1893
    %v1895 = vsel %vm1894, %v1886, %v1891
    %v1896 = vrsqrt.pop %v1799
    %v1897 = vmul.f32 %v1896, %v1799
    %v1898 = vmul.f32 %v1897, %v1896
    %v1899 = vmul.f32 0.5, %v1898
    %v1900 = vsub.f32 1.5, %v1899
    %v1901 = vmul.f32 %v1896, %v1900
    %vm1902 = vweird.f32 %v1799
    %vm1903 = vweird.f32 %v1896
    %vm1904 = vmor %vm1902, %vm1903
    %v1905 = vsel %vm1904, %v1896, %v1901
    %v1906 = vrsqrt.pop %v1800
    %v1907 = vmul.f32 %v1906, %v1800
    %v1908 = vmul.f32 %v1907, %v1906
    %v1909 = vmul.f32 0.5, %v1908
    %v1910 = vsub.f32 1.5, %v1909
    %v1911 = vmul.f32 %v1906, %v1910
    %vm1912 = vweird.f32 %v1800
    %vm1913 = vweird.f32 %v1906
    %vm1914 = vmor %vm1912, %vm1913
    %v1915 = vsel %vm1914, %v1906, %v1911
    %v1916 = vrsqrt.pop %v1801
    %v1917 = vmul.f32 %v1916, %v1801
    %v1918 = vmul.f32 %v1917, %v1916
    %v1919 = vmul.f32 0.5, %v1918
    %v1920 = vsub.f32 1.5, %v1919
    %v1921 = vmul.f32 %v1916, %v1920
    %vm1922 = vweird.f32 %v1801
    %vm1923 = vweird.f32 %v1916
    %vm1924 = vmor %vm1922, %vm1923
    %v1925 = vsel %vm1924, %v1916, %v1921
    %v1926 = vrsqrt.pop %v1802
    %v1927 = vmul.f32 %v1926, %v1802
    %v1928 = vmul.f32 %v1927, %v1926
    %v1929 = vmul.f32 0.5, %v1928
    %v1930 = vsub.f32 1.5, %v1929
    %v1931 = vmul.f32 %v1926, %v1930
    %vm1932 = vweird.f32 %v1802
    %vm1933 = vweird.f32 %v1926
    %vm1934 = vmor %vm1932, %vm1933
    %v1935 = vsel %vm1934, %v1926, %v1931
    %v1936 = vrsqrt.pop %v1803
    %v1937 = vmul.f32 %v1936, %v1803
    %v1938 = vmul.f32 %v1937, %v1936
    %v1939 = vmul.f32 0.5, %v1938
    %v1940 = vsub.f32 1.5, %v1939
    %v1941 = vmul.f32 %v1936, %v1940
    %vm1942 = vweird.f32 %v1803
    %vm1943 = vweird.f32 %v1936
    %vm1944 = vmor %vm1942, %vm1943
    %v1945 = vsel %vm1944, %v1936, %v1941
    %v1946 = vrsqrt.pop %v1804
    %v1947 = vmul.f32 %v1946, %v1804
    %v1948 = vmul.f32 %v1947, %v1946
    %v1949 = vmul.f32 0.5, %v1948
    %v1950 = vsub.f32 1.5, %v1949
    %v1951 = vmul.f32 %v1946, %v1950
    %vm1952 = vweird.f32 %v1804
    %vm1953 = vweird.f32 %v1946
    %vm1954 = vmor %vm1952, %vm1953
    %v1955 = vsel %vm1954, %v1946, %v1951
    %v1956 = vrsqrt.pop %v1805
    %v1957 = vmul.f32 %v1956, %v1805
    %v1958 = vmul.f32 %v1957, %v1956
    %v1959 = vmul.f32 0.5, %v1958
    %v1960 = vsub.f32 1.5, %v1959
    %v1961 = vmul.f32 %v1956, %v1960
    %vm1962 = vweird.f32 %v1805
    %vm1963 = vweird.f32 %v1956
    %vm1964 = vmor %vm1962, %vm1963
    %v1965 = vsel %vm1964, %v1956, %v1961
    %v1966 = vmul.f32 %v1630, %v1815
    %v1967 = vmul.f32 %v1631, %v1825
    %v1968 = vmul.f32 %v1632, %v1835
    %v1969 = vmul.f32 %v1633, %v1845
    %v1970 = vmul.f32 %v1634, %v1855
    %v1971 = vmul.f32 %v1635, %v1865
    %v1972 = vmul.f32 %v1636, %v1875
    %v1973 = vmul.f32 %v1637, %v1885
    %v1974 = vmul.f32 %v1638, %v1895
    %v1975 = vmul.f32 %v1639, %v1905
    %v1976 = vmul.f32 %v1640, %v1915
    %v1977 = vmul.f32 %v1641, %v1925
    %v1978 = vmul.f32 %v1642, %v1935
    %v1979 = vmul.f32 %v1643, %v1945
    %v1980 = vmul.f32 %v1644, %v1955
    %v1981 = vmul.f32 %v1645, %v1965
    %1998 = vrot.lane.b32.xlu0 %v1502, 64
    %v1999 = vpop.permute.xlu0 %1998
    %2000 = vrot.lane.b32.xlu0 %v1503, 64
    %v2001 = vpop.permute.xlu0 %2000
    %2002 = vrot.lane.b32.xlu0 %v1504, 64
    %v2003 = vpop.permute.xlu0 %2002
    %2004 = vrot.lane.b32.xlu0 %v1505, 64
    %v2005 = vpop.permute.xlu0 %2004
    %2006 = vrot.lane.b32.xlu0 %v1506, 64
    %v2007 = vpop.permute.xlu0 %2006
    %2008 = vrot.lane.b32.xlu0 %v1507, 64
    %v2009 = vpop.permute.xlu0 %2008
    %2010 = vrot.lane.b32.xlu0 %v1508, 64
    %v2011 = vpop.permute.xlu0 %2010
    %2012 = vrot.lane.b32.xlu0 %v1509, 64
    %v2013 = vpop.permute.xlu0 %2012
    %2014 = vrot.lane.b32.xlu0 %v1510, 64
    %v2015 = vpop.permute.xlu0 %2014
    %2016 = vrot.lane.b32.xlu0 %v1511, 64
    %v2017 = vpop.permute.xlu0 %2016
    %2018 = vrot.lane.b32.xlu0 %v1512, 64
    %v2019 = vpop.permute.xlu0 %2018
    %2020 = vrot.lane.b32.xlu0 %v1513, 64
    %v2021 = vpop.permute.xlu0 %2020
    %2022 = vrot.lane.b32.xlu0 %v1514, 64
    %v2023 = vpop.permute.xlu0 %2022
    %2024 = vrot.lane.b32.xlu0 %v1515, 64
    %v2025 = vpop.permute.xlu0 %2024
    %2026 = vrot.lane.b32.xlu0 %v1516, 64
    %v2027 = vpop.permute.xlu0 %2026
    %2028 = vrot.lane.b32.xlu0 %v1517, 64
    %v2029 = vpop.permute.xlu0 %2028
    %2062 = vrot.lane.b32.xlu0 %v1966, 64
    %v2063 = vpop.permute.xlu0 %2062
    %2064 = vrot.lane.b32.xlu0 %v1967, 64
    %v2065 = vpop.permute.xlu0 %2064
    %2066 = vrot.lane.b32.xlu0 %v1968, 64
    %v2067 = vpop.permute.xlu0 %2066
    %2068 = vrot.lane.b32.xlu0 %v1969, 64
    %v2069 = vpop.permute.xlu0 %2068
    %2070 = vrot.lane.b32.xlu0 %v1970, 64
    %v2071 = vpop.permute.xlu0 %2070
    %2072 = vrot.lane.b32.xlu0 %v1971, 64
    %v2073 = vpop.permute.xlu0 %2072
    %2074 = vrot.lane.b32.xlu0 %v1972, 64
    %v2075 = vpop.permute.xlu0 %2074
    %2076 = vrot.lane.b32.xlu0 %v1973, 64
    %v2077 = vpop.permute.xlu0 %2076
    %2078 = vrot.lane.b32.xlu0 %v1974, 64
    %v2079 = vpop.permute.xlu0 %2078
    %2080 = vrot.lane.b32.xlu0 %v1975, 64
    %v2081 = vpop.permute.xlu0 %2080
    %2082 = vrot.lane.b32.xlu0 %v1976, 64
    %v2083 = vpop.permute.xlu0 %2082
    %2084 = vrot.lane.b32.xlu0 %v1977, 64
    %v2085 = vpop.permute.xlu0 %2084
    %2086 = vrot.lane.b32.xlu0 %v1978, 64
    %v2087 = vpop.permute.xlu0 %2086
    %2088 = vrot.lane.b32.xlu0 %v1979, 64
    %v2089 = vpop.permute.xlu0 %2088
    %2090 = vrot.lane.b32.xlu0 %v1980, 64
    %v2091 = vpop.permute.xlu0 %2090
    %2092 = vrot.lane.b32.xlu0 %v1981, 64
    %v2093 = vpop.permute.xlu0 %2092
    %v2110 = vsel %vm151, %v1999, %v2063
    %v2111 = vsel %vm151, %v2001, %v2065
    %v2112 = vsel %vm151, %v2003, %v2067
    %v2113 = vsel %vm151, %v2005, %v2069
    %v2114 = vsel %vm151, %v2007, %v2071
    %v2115 = vsel %vm151, %v2009, %v2073
    %v2116 = vsel %vm151, %v2011, %v2075
    %v2117 = vsel %vm151, %v2013, %v2077
    %v2118 = vsel %vm151, %v2015, %v2079
    %v2119 = vsel %vm151, %v2017, %v2081
    %v2120 = vsel %vm151, %v2019, %v2083
    %v2121 = vsel %vm151, %v2021, %v2085
    %v2122 = vsel %vm151, %v2023, %v2087
    %v2123 = vsel %vm151, %v2025, %v2089
    %v2124 = vsel %vm151, %v2027, %v2091
    %v2125 = vsel %vm151, %v2029, %v2093
    %v2126 = vmul.f32 %v2110, %v1001
    %v2127 = vmul.f32 %v2111, %v1001
    %v2128 = vmul.f32 %v2112, %v1001
    %v2129 = vmul.f32 %v2113, %v1001
    %v2130 = vmul.f32 %v2114, %v1001
    %v2131 = vmul.f32 %v2115, %v1001
    %v2132 = vmul.f32 %v2116, %v1001
    %v2133 = vmul.f32 %v2117, %v1001
    %v2134 = vmul.f32 %v2118, %v1001
    %v2135 = vmul.f32 %v2119, %v1001
    %v2136 = vmul.f32 %v2120, %v1001
    %v2137 = vmul.f32 %v2121, %v1001
    %v2138 = vmul.f32 %v2122, %v1001
    %v2139 = vmul.f32 %v2123, %v1001
    %v2140 = vmul.f32 %v2124, %v1001
    %v2141 = vmul.f32 %v2125, %v1001
    %v2142 = vadd.f32 %v2126, %v1020
    %v2143 = vadd.f32 %v2127, %v1020
    %v2144 = vadd.f32 %v2128, %v1020
    %v2145 = vadd.f32 %v2129, %v1020
    %v2146 = vadd.f32 %v2130, %v1020
    %v2147 = vadd.f32 %v2131, %v1020
    %v2148 = vadd.f32 %v2132, %v1020
    %v2149 = vadd.f32 %v2133, %v1020
    %v2150 = vadd.f32 %v2134, %v1020
    %v2151 = vadd.f32 %v2135, %v1020
    %v2152 = vadd.f32 %v2136, %v1020
    %v2153 = vadd.f32 %v2137, %v1020
    %v2154 = vadd.f32 %v2138, %v1020
    %v2155 = vadd.f32 %v2139, %v1020
    %v2156 = vadd.f32 %v2140, %v1020
    %v2157 = vadd.f32 %v2141, %v1020
    %s2158 = scalar_lea.vmem [#allocation2], 8
    %2159 = vst.msk [vmem:[%s2158] sm:$0xff] %vm75, %v2142
    %2160 = vst.msk [vmem:[%s2158 + $0x10] sm:$0xff] %vm75, %v2143
    %2161 = vst.msk [vmem:[%s2158 + $0x20] sm:$0xff] %vm75, %v2144
    %2162 = vst.msk [vmem:[%s2158 + $0x30] sm:$0xff] %vm75, %v2145
    %2163 = vst.msk [vmem:[%s2158 + $0x40] sm:$0xff] %vm75, %v2146
    %2164 = vst.msk [vmem:[%s2158 + $0x50] sm:$0xff] %vm75, %v2147
    %2165 = vst.msk [vmem:[%s2158 + $0x60] sm:$0xff] %vm75, %v2148
    %2166 = vst.msk [vmem:[%s2158 + $0x70] sm:$0xff] %vm75, %v2149
    %2167 = vst.msk [vmem:[%s2158 + $0x80] sm:$0xff] %vm75, %v2150
    %2168 = vst.msk [vmem:[%s2158 + $0x90] sm:$0xff] %vm75, %v2151
    %2169 = vst.msk [vmem:[%s2158 + $0xa0] sm:$0xff] %vm75, %v2152
    %2170 = vst.msk [vmem:[%s2158 + $0xb0] sm:$0xff] %vm75, %v2153
    %2171 = vst.msk [vmem:[%s2158 + $0xc0] sm:$0xff] %vm75, %v2154
    %2172 = vst.msk [vmem:[%s2158 + $0xd0] sm:$0xff] %vm75, %v2155
    %2173 = vst.msk [vmem:[%s2158 + $0xe0] sm:$0xff] %vm75, %v2156
    %2174 = vst.msk [vmem:[%s2158 + $0xf0] sm:$0xff] %vm75, %v2157
    // Predicated region
    $region18: #{tpu_custom_call.1} parent=1 // pred_check
      _
    $region19: #{tpu_custom_call.1} parent=1 // pred_check_branch
      %2176 = sbr.rel (0) target = $region21
    $region20: #{tpu_custom_call.1} parent=1 // pred_region
      %2178 = vsyncadd [#allocation3], 0
      %s2179 = sshll.u32 [#allocation2], 4
      %s2180 = int_to_ptr.vmem [resolvable:$true] %s2179
      %s2181 = sshll.u32 %s4, 4
      %s2182 = int_to_ptr.hbm [resolvable:$true] %s2181
      %2187 = dma.vmem_to_hbm [thread:$0]  %s2180, 4096, %s2182, [#allocation3], 128, 128, 8
    $region21: #{tpu_custom_call.1} parent=1 // pred_fallthru
      _
    // Predicated region
    $region22: #{tpu_custom_call.1} parent=1 // pred_check
      _
    $region23: #{tpu_custom_call.1} parent=1 // pred_check_branch
      %2189 = sbr.rel (0) target = $region25
    $region24: #{tpu_custom_call.1} parent=1 // pred_region
      %2191 = dma.done [#allocation3], 4096
    $region25: #{tpu_custom_call.1} parent=1 // pred_fallthru
      _
    %2192 = vsyncpa [#allocation3], 1

</llo_original>
